<compile_context>
chip_gen: v7x
topology: tpu7x:2x2x1
jax: 0.10.0
libtpu: 0.0.40
codegen_flags: <defaults>
</compile_context>

<pallas_src>
import functools

import jax
import jax.numpy as jnp
from jax.experimental import pallas as pl
from jax.experimental.pallas import tpu as pltpu


def _round_up(x, m):
    return ((x + m - 1) // m) * m


# ---------------------------------------------------------------------------
# Fused Pallas kernel
# ---------------------------------------------------------------------------
def _fused_tucker2_kernel(*refs, kh, kw, sh, sw, th, wo, hh, ww, ph, pw,
                          p_store, folded):
    """One grid step = (batch image b, output-row block r).

    refs (folded)   : x, w1, wt2, b, out, h1p
    refs (unfolded) : x, w1, wt2, w3, b, out, h1p
      x    : [Cin, H*W]       whole image, flat pixels on lanes, original dtype
      w1   : [Rin, Cin]       1x1 in-conv weight (compute dtype)
      wt2  : [M2, KH*KW*Rin]  im2col-ordered core weights (M2 = Cout if the
                              1x1 out-conv is folded in, else Rout)
      w3   : [Cout, Rout]     1x1 out-conv weight (unfolded path only)
      b    : [Cout, 1]        bias (f32)
      out  : [Cout, p_store]  lane-dense output tile
      h1p  : [Rin, Hp, Wp]    persistent VMEM scratch: zero-padded 1x1-conv
                              activations of the current batch image
    """
    if folded:
        x_ref, w1_ref, wt_ref, b_ref, o_ref, h1p_ref = refs
        w3_ref = None
    else:
        x_ref, w1_ref, wt_ref, w3_ref, b_ref, o_ref, h1p_ref = refs

    rin = w1_ref.shape[0]
    hp_pad = h1p_ref.shape[1]
    th_in = (th - 1) * sh + kh
    p = th * wo
    r = pl.program_id(1)

    # -- Stage 1 (once per batch image): 1x1 in-conv over the whole image,
    #    written zero-padded into the persistent VMEM scratch.  Input pad and
    #    compute-dtype cast happen here, never as an extra HBM pass. --------
    @pl.when(r == 0)
    def _stage1():
        if ph > 0 or pw > 0:
            h1p_ref[...] = jnp.zeros(h1p_ref.shape, h1p_ref.dtype)
        x = x_ref[...].astype(w1_ref.dtype)                       # [Cin, H*W]
        h1 = jnp.dot(w1_ref[...], x,
                     preferred_element_type=jnp.float32)          # [Rin, H*W]
        h1 = h1.astype(h1p_ref.dtype).reshape(rin, hh, ww)
        h1p_ref[:, ph:ph + hh, pw:pw + ww] = h1

    # -- Stage 2: KxK core conv as ONE matmul.  The im2col column slab
    #    [KH*KW*Rin, th*wo] is gathered once per tile from the in-VMEM h1
    #    slab (single merge relayout); it never touches HBM. ----------------
    if th_in == hp_pad:                         # single row block: whole slab
        slab = h1p_ref[...]
    else:
        row_step = th * sh
        row0 = r * row_step
        if row_step & (row_step - 1) == 0:      # alignment hint when possible
            row0 = pl.multiple_of(row0, row_step)
        slab = h1p_ref[:, pl.ds(row0, th_in), :]        # [Rin, th_in, Wp]

    if sw == 1:
        phases = [slab]
    else:
        # Deinterleave the lane (column) axis into stride phases once per
        # tile instead of a strided lane gather inside every tap.
        phases = [slab[:, :, s::sw] for s in range(sw)]

    wins = []
    for i in range(kh):
        for j in range(kw):
            src = phases[j % sw]
            c0 = j // sw
            win = src[:, i:i + (th - 1) * sh + 1:sh, c0:c0 + wo]  # [Rin,th,wo]
            wins.append(win)
    col = jnp.concatenate(wins, axis=0).reshape(kh * kw * rin, p)
    acc = jnp.dot(wt_ref[...], col,
                  preferred_element_type=jnp.float32)             # [M2, p]

    # -- Stage 3: optional 1x1 out-conv; bias add + cast stay f32 (VPU). ----
    if not folded:
        acc = jnp.dot(w3_ref[...], acc.astype(w3_ref.dtype),
                      preferred_element_type=jnp.float32)         # [Cout, p]
    res = acc + b_ref[...]
    if p_store > p:   # lane-pad so the store is a full, unmasked vst
        res = jnp.concatenate(
            [res, jnp.zeros((res.shape[0], p_store - p), res.dtype)], axis=1)
    o_ref[...] = res.astype(o_ref.dtype)


# ---------------------------------------------------------------------------
# Tiling / VMEM helpers
# ---------------------------------------------------------------------------
def _choose_row_tile(ho, wo, target_pixels):
    """Largest output-row tile TH (divisor of Ho) with TH*Wo lane-dense
    (multiple of 128) and <= target_pixels.  If the image is small, or no
    aligned divisor exists, a single whole-image tile is used (the kernel
    lane-pads the store), so multi-block tiles are always 128-aligned."""
    if ho * wo <= target_pixels:
        return ho
    best = None
    for th in range(1, ho + 1):
        if ho % th == 0 and (th * wo) % 128 == 0 and th * wo <= target_pixels:
            best = th
    return ho if best is None else best


def _vmem_limit_bytes():
    # 128 MiB parts (v5e/v6e) benefit from a large scoped-VMEM window; cap
    # at 3/4 of physical so the setting stays portable to v7x (64 MiB).
    try:
        cap = pltpu.get_tpu_info().vmem_capacity_bytes
        return min(96 * 1024 * 1024, (cap * 3) // 4)
    except Exception:
        return 32 * 1024 * 1024


# ---------------------------------------------------------------------------
# Forward pass (wrapper == nn.Module.forward)
# ---------------------------------------------------------------------------
def tucker2_decomposed_conv_forward(x_nchw, w_in, w_core, w_out, bias,
                                    stride=(1, 1), padding=(1, 1),
                                    compute_dtype=jnp.bfloat16,
                                    target_pixels=4096):
    """
    x_nchw : [N, Cin, H, W]        (PyTorch NCHW input)
    w_in   : [Rin, Cin, 1, 1]      (in_channel_layer.weight)
    w_core : [Rout, Rin, KH, KW]   (core_layer.weight)
    w_out  : [Cout, Rout, 1, 1]    (out_channel_layer.weight)
    bias   : [Cout] or None        (out_channel_layer.bias)
    returns: [N, Cout, Ho, Wo]     (NCHW)
    """
    n, cin, h, w = x_nchw.shape
    rin = w_in.shape[0]
    rout, _, kh, kw = w_core.shape
    cout = w_out.shape[0]
    sh, sw = stride
    ph, pw = padding
    hp, wp = h + 2 * ph, w + 2 * pw
    ho = (hp - kh) // sh + 1
    wo = (wp - kw) // sw + 1
    out_dtype = x_nchw.dtype

    # ---- trace-time glue: O(params) reshapes only; NO pad/cast pass over
    # the activations (those happen inside the kernel). ----------------------
    x_flat = x_nchw.reshape(n, cin, h * w)                       # free reshape
    w1 = w_in[:, :, 0, 0].astype(compute_dtype)                  # [Rin, Cin]
    w3 = w_out[:, :, 0, 0]                                       # [Cout, Rout]
    if bias is None:
        bias = jnp.zeros((cout,), jnp.float32)
    b2d = bias.astype(jnp.float32).reshape(cout, 1)

    # Per-tap core weights in im2col order; fold the 1x1 out-conv into the
    # taps only when it does not inflate the MXU work (FLOP comparison).
    core_taps = jnp.transpose(w_core, (2, 3, 0, 1)).reshape(kh * kw, rout, rin)
    folded = kh * kw * rin * cout <= kh * kw * rin * rout + rout * cout
    if folded:
        taps = jnp.einsum("cr,krm->kcm", w3, core_taps)          # [KK, Cout, Rin]
        m2 = cout
    else:
        taps = core_taps                                         # [KK, Rout, Rin]
        m2 = rout
    wt2 = jnp.transpose(taps, (1, 0, 2)).reshape(m2, kh * kw * rin)
    wt2 = wt2.astype(compute_dtype)

    th = _choose_row_tile(ho, wo, target_pixels)
    nrb = ho // th
    p = th * wo
    p_store = _round_up(p, 128) if nrb == 1 else p               # lane-dense

    kernel = functools.partial(
        _fused_tucker2_kernel, kh=kh, kw=kw, sh=sh, sw=sw, th=th, wo=wo,
        hh=h, ww=w, ph=ph, pw=pw, p_store=p_store, folded=folded)

    in_specs = [
        # Whole (unpadded, original-dtype) image of batch b, flat pixels on
        # lanes.  The block index is constant across row blocks, so the image
        # is DMA'd from HBM exactly once per batch image.
        pl.BlockSpec((None, cin, h * w), lambda b, r: (b, 0, 0)),
        pl.BlockSpec((rin, cin), lambda b, r: (0, 0)),
        pl.BlockSpec((m2, kh * kw * rin), lambda b, r: (0, 0)),
    ]
    args = [x_flat, w1, wt2]
    if not folded:
        in_specs.append(pl.BlockSpec((cout, m2), lambda b, r: (0, 0)))
        args.append(w3.astype(compute_dtype))
    in_specs.append(pl.BlockSpec((cout, 1), lambda b, r: (0, 0)))
    args.append(b2d)

    out = pl.pallas_call(
        kernel,
        out_shape=jax.ShapeDtypeStruct((n, cout, nrb * p_store), out_dtype),
        grid=(n, nrb),
        in_specs=in_specs,
        out_specs=pl.BlockSpec((None, cout, p_store), lambda b, r: (b, 0, r)),
        scratch_shapes=[pltpu.VMEM((rin, hp, wp), compute_dtype)],
        compiler_params=pltpu.CompilerParams(
            # batch is the megacore 'parallel' axis; the row-block axis
            # carries the h1p scratch dependence -> 'arbitrary'.
            dimension_semantics=("parallel", "arbitrary"),
            vmem_limit_bytes=_vmem_limit_bytes()),
    )(*args)

    if nrb * p_store != ho * wo:
        out = out[:, :, :ho * wo]          # drop the lane padding (small case)
    return out.reshape(n, cout, ho, wo)


# ---------------------------------------------------------------------------
# Pure-JAX reference (XLA convs) for verification
# ---------------------------------------------------------------------------
def _reference(x, w_in, w_core, w_out, bias, stride, padding):
    dn = ("NCHW", "OIHW", "NCHW")
    y = jax.lax.conv_general_dilated(x, w_in, (1, 1), "VALID", dimension_numbers=dn)
    y = jax.lax.conv_general_dilated(
        y, w_core, stride,
        [(padding[0], padding[0]), (padding[1], padding[1])],
        dimension_numbers=dn)
    y = jax.lax.conv_general_dilated(y, w_out, (1, 1), "VALID", dimension_numbers=dn)
    return y + bias[None, :, None, None]


def _make_inputs(key, n, cin, hw, cout, out_rank, in_rank, khw):
    k1, k2, k3, k4, k5 = jax.random.split(key, 5)
    x = jax.random.normal(k1, (n, cin, hw, hw), jnp.float32)
    w_in = jax.random.normal(k2, (in_rank, cin, 1, 1), jnp.float32) * 0.3
    w_core = jax.random.normal(k3, (out_rank, in_rank, khw, khw), jnp.float32) * 0.3
    w_out = jax.random.normal(k4, (cout, out_rank, 1, 1), jnp.float32) * 0.3
    bias = jax.random.normal(k5, (cout,), jnp.float32) * 0.1
    return x, w_in, w_core, w_out, bias


if __name__ == "__main__":
    key = jax.random.PRNGKey(0)
    ka, kb, kc = jax.random.split(key, 3)

    # --- Test 1: module defaults (batch=2, Cin=4, 16x16, Cout=8, ranks 3/2,
    # 3x3 core, stride 1, pad 1).  Unfolded path, single row block. ---------
    x, w_in, w_core, w_out, bias = _make_inputs(ka, 2, 4, 16, 8, 3, 2, 3)
    y_ref = _reference(x, w_in, w_core, w_out, bias, (1, 1), (1, 1))

    y32 = jax.block_until_ready(tucker2_decomposed_conv_forward(
        x, w_in, w_core, w_out, bias, (1, 1), (1, 1),
        compute_dtype=jnp.float32))
    assert y32.shape == y_ref.shape == (2, 8, 16, 16), (y32.shape, y_ref.shape)
    assert jnp.allclose(y32, y_ref, atol=1e-4, rtol=1e-4), float(
        jnp.max(jnp.abs(y32 - y_ref)))

    ybf = jax.block_until_ready(tucker2_decomposed_conv_forward(
        x, w_in, w_core, w_out, bias, (1, 1), (1, 1),
        compute_dtype=jnp.bfloat16))
    assert ybf.shape == y_ref.shape
    assert jnp.allclose(ybf, y_ref, atol=5e-2, rtol=5e-2), float(
        jnp.max(jnp.abs(ybf - y_ref)))

    # --- Test 2: 13x13 image (Ho*Wo=169 not 128-aligned -> lane-padded,
    # unmasked store path) with the folded out-conv path. -------------------
    x, w_in, w_core, w_out, bias = _make_inputs(kb, 1, 4, 13, 6, 5, 2, 3)
    y_ref = _reference(x, w_in, w_core, w_out, bias, (1, 1), (1, 1))
    y2 = jax.block_until_ready(tucker2_decomposed_conv_forward(
        x, w_in, w_core, w_out, bias, (1, 1), (1, 1),
        compute_dtype=jnp.float32))
    assert y2.shape == y_ref.shape == (1, 6, 13, 13)
    assert jnp.allclose(y2, y_ref, atol=1e-4, rtol=1e-4), float(
        jnp.max(jnp.abs(y2 - y_ref)))

    # --- Test 3: 32x32 image with a small target_pixels to force multiple
    # 128-aligned row blocks (exercises the persistent h1p scratch reuse). --
    x, w_in, w_core, w_out, bias = _make_inputs(kc, 2, 4, 32, 8, 3, 2, 3)
    y_ref = _reference(x, w_in, w_core, w_out, bias, (1, 1), (1, 1))
    y3 = jax.block_until_ready(tucker2_decomposed_conv_forward(
        x, w_in, w_core, w_out, bias, (1, 1), (1, 1),
        compute_dtype=jnp.float32, target_pixels=512))
    assert y3.shape == y_ref.shape == (2, 8, 32, 32)
    assert jnp.allclose(y3, y_ref, atol=1e-4, rtol=1e-4), float(
        jnp.max(jnp.abs(y3 - y_ref)))

    print("KERNEL_OK")
</pallas_src>

<mosaic_0001>
module attributes {stable_mosaic.version = 11 : i64} {
  func.func @_fused_tucker2_kernel(%arg0: i32, %arg1: i32, %arg2: memref<1x4x256xf32, #tpu.memory_space<vmem>>, %arg3: memref<2x4xf32, #tpu.memory_space<vmem>>, %arg4: memref<3x18xf32, #tpu.memory_space<vmem>>, %arg5: memref<8x3xf32, #tpu.memory_space<vmem>>, %arg6: memref<8x1xf32, #tpu.memory_space<vmem>>, %arg7: memref<1x8x256xf32, #tpu.memory_space<vmem>>, %arg8: memref<2x18x18xf32, #tpu.memory_space<vmem>>) attributes {dimension_semantics = [#tpu.dimension_semantics<parallel>, #tpu.dimension_semantics<arbitrary>], iteration_bounds = array<i64: 2, 1>, scalar_prefetch = 0 : i64, scratch_operands = 1 : i64, tpu.core_type = #tpu.core_type<tc>, window_params = [{transform_indices = @transform_0, window_bounds = array<i64: 1, 4, 256>}, {pipeline_mode = #tpu.pipeline_mode<synchronous>, transform_indices = @transform_1, window_bounds = array<i64: 2, 4>}, {pipeline_mode = #tpu.pipeline_mode<synchronous>, transform_indices = @transform_2, window_bounds = array<i64: 3, 18>}, {pipeline_mode = #tpu.pipeline_mode<synchronous>, transform_indices = @transform_3, window_bounds = array<i64: 8, 3>}, {pipeline_mode = #tpu.pipeline_mode<synchronous>, transform_indices = @transform_4, window_bounds = array<i64: 8, 1>}, {transform_indices = @transform_5, window_bounds = array<i64: 1, 8, 256>}]} {
    %c0_i32 = arith.constant 0 : i32
    %0 = arith.cmpi eq, %arg1, %c0_i32 : i32
    %1 = arith.extui %0 : i1 to i32
    %c0_i32_0 = arith.constant 0 : i32
    %2 = arith.cmpi ne, %1, %c0_i32_0 : i32
    scf.if %2 {
      %cst_13 = arith.constant 0.000000e+00 : f32
      %25 = vector.broadcast %cst_13 : f32 to vector<2x18x18xf32>
      %c0_14 = arith.constant 0 : index
      %c0_15 = arith.constant 0 : index
      %c0_16 = arith.constant 0 : index
      %26 = vector.load %arg8[%c0_14, %c0_15, %c0_16] : memref<2x18x18xf32, #tpu.memory_space<vmem>>, vector<2x18x18xf32>
      tpu.vector_store %arg8[%c0_14, %c0_15, %c0_16], %25 {strides = array<i32>} : memref<2x18x18xf32, #tpu.memory_space<vmem>>, vector<2x18x18xf32>,
      %c0_17 = arith.constant 0 : index
      %c0_18 = arith.constant 0 : index
      %c0_19 = arith.constant 0 : index
      %27 = vector.load %arg2[%c0_17, %c0_18, %c0_19] : memref<1x4x256xf32, #tpu.memory_space<vmem>>, vector<1x4x256xf32>
      %28 = vector.shape_cast %27 : vector<1x4x256xf32> to vector<4x256xf32>
      %c0_20 = arith.constant 0 : index
      %c0_21 = arith.constant 0 : index
      %29 = vector.load %arg3[%c0_20, %c0_21] : memref<2x4xf32, #tpu.memory_space<vmem>>, vector<2x4xf32>
      %cst_22 = arith.constant dense<0.000000e+00> : vector<2x256xf32>
      %30 = tpu.matmul %29, %28, %cst_22 {dimension_numbers = #tpu.dot_dimension_numbers<[1], [0], [0], [1], [0, 0, 1, 1], [], []>} : vector<2x4xf32>, vector<4x256xf32>, vector<2x256xf32> -> vector<2x256xf32>
      %31 = vector.shape_cast %30 : vector<2x256xf32> to vector<2x16x16xf32>
      %c0_23 = arith.constant 0 : index
      %c1 = arith.constant 1 : index
      %c1_24 = arith.constant 1 : index
      %32 = vector.load %arg8[%c0_23, %c1, %c1_24] : memref<2x18x18xf32, #tpu.memory_space<vmem>>, vector<2x16x16xf32>
      tpu.vector_store %arg8[%c0_23, %c1, %c1_24], %31 {strides = array<i32>} : memref<2x18x18xf32, #tpu.memory_space<vmem>>, vector<2x16x16xf32>,
    } else {
    }
    %c0 = arith.constant 0 : index
    %c0_1 = arith.constant 0 : index
    %c0_2 = arith.constant 0 : index
    %3 = vector.load %arg8[%c0, %c0_1, %c0_2] : memref<2x18x18xf32, #tpu.memory_space<vmem>>, vector<2x18x18xf32>
    %4 = vector.extract_strided_slice %3 {offsets = [0, 0, 0], sizes = [2, 16, 16], strides = [1, 1, 1]} : vector<2x18x18xf32> to vector<2x16x16xf32>
    %5 = vector.extract_strided_slice %3 {offsets = [0, 0, 1], sizes = [2, 16, 16], strides = [1, 1, 1]} : vector<2x18x18xf32> to vector<2x16x16xf32>
    %6 = vector.extract_strided_slice %3 {offsets = [0, 0, 2], sizes = [2, 16, 16], strides = [1, 1, 1]} : vector<2x18x18xf32> to vector<2x16x16xf32>
    %7 = vector.extract_strided_slice %3 {offsets = [0, 1, 0], sizes = [2, 16, 16], strides = [1, 1, 1]} : vector<2x18x18xf32> to vector<2x16x16xf32>
    %8 = vector.extract_strided_slice %3 {offsets = [0, 1, 1], sizes = [2, 16, 16], strides = [1, 1, 1]} : vector<2x18x18xf32> to vector<2x16x16xf32>
    %9 = vector.extract_strided_slice %3 {offsets = [0, 1, 2], sizes = [2, 16, 16], strides = [1, 1, 1]} : vector<2x18x18xf32> to vector<2x16x16xf32>
    %10 = vector.extract_strided_slice %3 {offsets = [0, 2, 0], sizes = [2, 16, 16], strides = [1, 1, 1]} : vector<2x18x18xf32> to vector<2x16x16xf32>
    %11 = vector.extract_strided_slice %3 {offsets = [0, 2, 1], sizes = [2, 16, 16], strides = [1, 1, 1]} : vector<2x18x18xf32> to vector<2x16x16xf32>
    %12 = vector.extract_strided_slice %3 {offsets = [0, 2, 2], sizes = [2, 16, 16], strides = [1, 1, 1]} : vector<2x18x18xf32> to vector<2x16x16xf32>
    %13 = tpu.concatenate %4, %5, %6, %7, %8, %9, %10, %11, %12 in 0 : vector<2x16x16xf32>, vector<2x16x16xf32>, vector<2x16x16xf32>, vector<2x16x16xf32>, vector<2x16x16xf32>, vector<2x16x16xf32>, vector<2x16x16xf32>, vector<2x16x16xf32>, vector<2x16x16xf32> -> vector<18x16x16xf32>
    %14 = vector.shape_cast %13 : vector<18x16x16xf32> to vector<18x256xf32>
    %c0_3 = arith.constant 0 : index
    %c0_4 = arith.constant 0 : index
    %15 = vector.load %arg4[%c0_3, %c0_4] : memref<3x18xf32, #tpu.memory_space<vmem>>, vector<3x18xf32>
    %cst = arith.constant dense<0.000000e+00> : vector<3x256xf32>
    %16 = tpu.matmul %15, %14, %cst {dimension_numbers = #tpu.dot_dimension_numbers<[1], [0], [0], [1], [0, 0, 1, 1], [], []>} : vector<3x18xf32>, vector<18x256xf32>, vector<3x256xf32> -> vector<3x256xf32>
    %c0_5 = arith.constant 0 : index
    %c0_6 = arith.constant 0 : index
    %17 = vector.load %arg5[%c0_5, %c0_6] : memref<8x3xf32, #tpu.memory_space<vmem>>, vector<8x3xf32>
    %cst_7 = arith.constant dense<0.000000e+00> : vector<8x256xf32>
    %18 = tpu.matmul %17, %16, %cst_7 {dimension_numbers = #tpu.dot_dimension_numbers<[1], [0], [0], [1], [0, 0, 1, 1], [], []>} : vector<8x3xf32>, vector<3x256xf32>, vector<8x256xf32> -> vector<8x256xf32>
    %c0_8 = arith.constant 0 : index
    %c0_9 = arith.constant 0 : index
    %19 = vector.load %arg6[%c0_8, %c0_9] : memref<8x1xf32, #tpu.memory_space<vmem>>, vector<8x1xf32>
    %20 = vector.broadcast %19 : vector<8x1xf32> to vector<8x256xf32>
    %21 = arith.addf %18, %20 : vector<8x256xf32>
    %c0_10 = arith.constant 0 : index
    %c0_11 = arith.constant 0 : index
    %c0_12 = arith.constant 0 : index
    %22 = vector.load %arg7[%c0_10, %c0_11, %c0_12] : memref<1x8x256xf32, #tpu.memory_space<vmem>>, vector<1x8x256xf32>
    %23 = vector.shape_cast %22 : vector<1x8x256xf32> to vector<8x256xf32>
    %24 = vector.shape_cast %21 : vector<8x256xf32> to vector<1x8x256xf32>
    tpu.vector_store %arg7[%c0_10, %c0_11, %c0_12], %24 {strides = array<i32>} : memref<1x8x256xf32, #tpu.memory_space<vmem>>, vector<1x8x256xf32>,
    return
  }
  func.func @transform_0(%arg0: i32, %arg1: i32) -> (i32, i32, i32) {
    %c0_i32 = arith.constant 0 : i32
    %c0_i32_0 = arith.constant 0 : i32
    %c0_i32_1 = arith.constant 0 : i32
    return %arg0, %c0_i32, %c0_i32_0 : i32, i32, i32
  }
  func.func @transform_1(%arg0: i32, %arg1: i32) -> (i32, i32) {
    %c0_i32 = arith.constant 0 : i32
    %c0_i32_0 = arith.constant 0 : i32
    %c0_i32_1 = arith.constant 0 : i32
    return %c0_i32, %c0_i32_0 : i32, i32
  }
  func.func @transform_2(%arg0: i32, %arg1: i32) -> (i32, i32) {
    %c0_i32 = arith.constant 0 : i32
    %c0_i32_0 = arith.constant 0 : i32
    %c0_i32_1 = arith.constant 0 : i32
    return %c0_i32, %c0_i32_0 : i32, i32
  }
  func.func @transform_3(%arg0: i32, %arg1: i32) -> (i32, i32) {
    %c0_i32 = arith.constant 0 : i32
    %c0_i32_0 = arith.constant 0 : i32
    %c0_i32_1 = arith.constant 0 : i32
    return %c0_i32, %c0_i32_0 : i32, i32
  }
  func.func @transform_4(%arg0: i32, %arg1: i32) -> (i32, i32) {
    %c0_i32 = arith.constant 0 : i32
    %c0_i32_0 = arith.constant 0 : i32
    %c0_i32_1 = arith.constant 0 : i32
    return %c0_i32, %c0_i32_0 : i32, i32
  }
  func.func @transform_5(%arg0: i32, %arg1: i32) -> (i32, i32, i32) {
    %c0_i32 = arith.constant 0 : i32
    %c0_i32_0 = arith.constant 0 : i32
    return %arg0, %c0_i32, %arg1 : i32, i32, i32
  }
}

</mosaic_0001>

<llo_original>
// kernel: tpu_custom_call.1
$region0: #{tpu_custom_call.1}
  #allocation0 [shape = 'u32[]', space=smem, size = 0x4, offset = 0x4, fixed_abs, tag = 'smem constant byte address 0x4 - core index']
  #allocation1 [shape = 'u32[144,128]{1,0:T(1,128)}', space=vmem, size = 0x12000, scoped, tag = 'internal scratch']
  #allocation2 [shape = 'f32[2,18,18]{2,1,0:T(8,128)}', space=vmem, size = 0x6000, scoped, tag = 'scratch operand']
  %s0 = inlined_call_operand.vmem [shape: f32[2,4,256], index: 0, kind: input, shape index: {}]
  %s1 = inlined_call_operand.vmem [shape: f32[2,4], index: 1, kind: input, shape index: {}]
  %s2 = inlined_call_operand.vmem [shape: f32[3,18], index: 2, kind: input, shape index: {}]
  %s3 = inlined_call_operand.vmem [shape: f32[8,3], index: 3, kind: input, shape index: {}]
  %s4 = inlined_call_operand.vmem [shape: f32[8,1], index: 4, kind: input, shape index: {}]
  %s5 = inlined_call_operand.hbm [shape: f32[2,8,256], index: 5, kind: output, shape index: {}]
  %s6 = sld [smem:[#allocation0]]
  $region57: #{tpu_custom_call.1} parent=0
    _
  %s8 = ssub.s32 1, %s6
  %s9 = scalar_select 0, %s8, %s6
  $region1: #{tpu_custom_call.1} parent=0
    #allocation3 [shape = 'u8[16384]{0}', space=vmem, size = 0x4000, scoped, tag = 'output window, operand 0']
    #allocation4 [shape = 's32[2]{0}', space=sflag, size = 0x8, scoped, tag = 'scoped memory for tpu_custom_call.1']
    %10 = vsyncpa [#allocation4], 0
    %s11 = scalar_lea.sflag [#allocation4], 1
    %12 = vsyncpa %s11, 0
    loop: start=0, step=1, limit=4
    $region2: #{tpu_custom_call.1} parent=1 // loop_pre_header
      _
    $region3: #{tpu_custom_call.1} parent=1 // loop_header
      %s14 = sphi 0, %s18
      %p15 = scmp.ge.s32.totalorder %s14, 4
      %s21 = sphi 0, %s33
      %s22 = sphi 0, %s29
      %s23 = sphi 0, %s21
      %s24 = sphi 0, %s22
      %s25 = sphi 0, %s23
      %s26 = sphi 0, %s24
      %s36 = sphi 0, %s38
      %s39 = sphi 0, %s36
      %s40 = sphi 0, %s39
      %s56 = sphi 0, %s40
      %s60 = sphi 0, %s60
      %s62 = sphi 0, %s60
      %s63 = sphi 0, %s62
      %s77 = sphi 0, %s63
      %s81 = sphi 0, %s81
      %s83 = sphi 0, %s81
      %s84 = sphi 0, %s83
      %s98 = sphi 0, %s84
      %s102 = sphi 0, %s102
      %s104 = sphi 0, %s102
      %s105 = sphi 0, %s104
      %s119 = sphi 0, %s105
      %s123 = sphi 0, %s123
      %s125 = sphi 0, %s123
      %s126 = sphi 0, %s125
      %s140 = sphi 0, %s126
      %s148 = sphi 0, %s150
      %s151 = sphi 0, %s148
      %s152 = sphi 0, %s151
      %s168 = sphi 0, %s152
    $region4: #{tpu_custom_call.1} parent=1 // loop_header_branch
      %17 = sbr.rel (%p15) target = $region8
    $region5: #{tpu_custom_call.1} parent=1 // loop_body
      %s19 = ssub.s32 %s14, 1
      %s20 = ssub.s32 %s14, 2
      %s27 = sadd.s32 1, %s22
      %p28 = scmp.ge.s32.totalorder %s27, 1
      %s29 = scalar_select %p28, 0, %s27
      %s30 = sadd.s32 1, %s21
      %s31 = scalar_select %p28, %s30, %s21
      %p32 = scmp.ge.s32.totalorder %s31, 2
      %s33 = scalar_select %p32, 0, %s31
      %s34 = ssub.s32 %s21, %s33
      %p35 = scmp.eq.s32.totalorder %s34, 0
      %s37 = sadd.s32 %s36, 1
      %s38 = scalar_select %p35, %s36, %s37
      %p41 = pneg %p35
      %p42 = scmp.eq.s32.totalorder %s14, 1
      %p43 = por %p41, %p42
      %p44 = scmp.ne.s32.totalorder %s36, %s39
      %p45 = scmp.eq.s32.totalorder %s14, 0
      %p46 = por %p44, %p45
      %p47 = scmp.ne.s32.totalorder %s36, %s39
      %p48 = scmp.eq.s32.totalorder %s19, 1
      %p49 = por %p47, %p48
      %p50 = scmp.ne.s32.totalorder %s39, %s40
      %p51 = scmp.eq.s32.totalorder %s19, 0
      %p52 = por %p50, %p51
      %p53 = scmp.ne.s32.totalorder %s39, %s40
      %p54 = scmp.eq.s32.totalorder %s20, 1
      %p55 = por %p53, %p54
      %p57 = scmp.ne.s32.totalorder %s40, %s56
      %p58 = scmp.eq.s32.totalorder %s20, 0
      %p59 = por %p57, %p58
      %s61 = sadd.s32 %s60, 1
      %p64 = scmp.eq.s32.totalorder %s14, 1
      %p65 = scmp.ne.s32.totalorder %s60, %s62
      %p66 = scmp.eq.s32.totalorder %s14, 0
      %p67 = por %p65, %p66
      %p68 = scmp.ne.s32.totalorder %s60, %s62
      %p69 = scmp.eq.s32.totalorder %s19, 1
      %p70 = por %p68, %p69
      %p71 = scmp.ne.s32.totalorder %s62, %s63
      %p72 = scmp.eq.s32.totalorder %s19, 0
      %p73 = por %p71, %p72
      %p74 = scmp.ne.s32.totalorder %s62, %s63
      %p75 = scmp.eq.s32.totalorder %s20, 1
      %p76 = por %p74, %p75
      %p78 = scmp.ne.s32.totalorder %s63, %s77
      %p79 = scmp.eq.s32.totalorder %s20, 0
      %p80 = por %p78, %p79
      %s82 = sadd.s32 %s81, 1
      %p85 = scmp.eq.s32.totalorder %s14, 1
      %p86 = scmp.ne.s32.totalorder %s81, %s83
      %p87 = scmp.eq.s32.totalorder %s14, 0
      %p88 = por %p86, %p87
      %p89 = scmp.ne.s32.totalorder %s81, %s83
      %p90 = scmp.eq.s32.totalorder %s19, 1
      %p91 = por %p89, %p90
      %p92 = scmp.ne.s32.totalorder %s83, %s84
      %p93 = scmp.eq.s32.totalorder %s19, 0
      %p94 = por %p92, %p93
      %p95 = scmp.ne.s32.totalorder %s83, %s84
      %p96 = scmp.eq.s32.totalorder %s20, 1
      %p97 = por %p95, %p96
      %p99 = scmp.ne.s32.totalorder %s84, %s98
      %p100 = scmp.eq.s32.totalorder %s20, 0
      %p101 = por %p99, %p100
      %s103 = sadd.s32 %s102, 1
      %p106 = scmp.eq.s32.totalorder %s14, 1
      %p107 = scmp.ne.s32.totalorder %s102, %s104
      %p108 = scmp.eq.s32.totalorder %s14, 0
      %p109 = por %p107, %p108
      %p110 = scmp.ne.s32.totalorder %s102, %s104
      %p111 = scmp.eq.s32.totalorder %s19, 1
      %p112 = por %p110, %p111
      %p113 = scmp.ne.s32.totalorder %s104, %s105
      %p114 = scmp.eq.s32.totalorder %s19, 0
      %p115 = por %p113, %p114
      %p116 = scmp.ne.s32.totalorder %s104, %s105
      %p117 = scmp.eq.s32.totalorder %s20, 1
      %p118 = por %p116, %p117
      %p120 = scmp.ne.s32.totalorder %s105, %s119
      %p121 = scmp.eq.s32.totalorder %s20, 0
      %p122 = por %p120, %p121
      %s124 = sadd.s32 %s123, 1
      %p127 = scmp.eq.s32.totalorder %s14, 1
      %p128 = scmp.ne.s32.totalorder %s123, %s125
      %p129 = scmp.eq.s32.totalorder %s14, 0
      %p130 = por %p128, %p129
      %p131 = scmp.ne.s32.totalorder %s123, %s125
      %p132 = scmp.eq.s32.totalorder %s19, 1
      %p133 = por %p131, %p132
      %p134 = scmp.ne.s32.totalorder %s125, %s126
      %p135 = scmp.eq.s32.totalorder %s19, 0
      %p136 = por %p134, %p135
      %p137 = scmp.ne.s32.totalorder %s125, %s126
      %p138 = scmp.eq.s32.totalorder %s20, 1
      %p139 = por %p137, %p138
      %p141 = scmp.ne.s32.totalorder %s126, %s140
      %p142 = scmp.eq.s32.totalorder %s20, 0
      %p143 = por %p141, %p142
      %s144 = ssub.s32 %s21, %s33
      %s145 = ssub.s32 %s22, %s29
      %s146 = sor.u32 %s144, %s145
      %p147 = scmp.eq.s32.totalorder %s146, 0
      %s149 = sadd.s32 %s148, 1
      %s150 = scalar_select %p147, %s148, %s149
      %p153 = pneg %p147
      %p154 = scmp.eq.s32.totalorder %s14, 1
      %p155 = por %p153, %p154
      %p156 = scmp.ne.s32.totalorder %s148, %s151
      %p157 = scmp.eq.s32.totalorder %s14, 0
      %p158 = por %p156, %p157
      %p159 = scmp.ne.s32.totalorder %s148, %s151
      %p160 = scmp.eq.s32.totalorder %s19, 1
      %p161 = por %p159, %p160
      %p162 = scmp.ne.s32.totalorder %s151, %s152
      %p163 = scmp.eq.s32.totalorder %s19, 0
      %p164 = por %p162, %p163
      %p165 = scmp.ne.s32.totalorder %s151, %s152
      %p166 = scmp.eq.s32.totalorder %s20, 1
      %p167 = por %p165, %p166
      %p169 = scmp.ne.s32.totalorder %s152, %s168
      %p170 = scmp.eq.s32.totalorder %s20, 0
      %p171 = por %p169, %p170
      %p172 = scmp.le.s32.totalorder 1, %s14
      %p173 = scmp.lt.s32.totalorder %s14, 3
      %p174 = pnand %p172, %p173
      %p175 = pneg %p174
      // Predicated region
      $region9: #{tpu_custom_call.1} parent=5 // pred_check
        _
      $region10: #{tpu_custom_call.1} parent=5 // pred_check_branch
        %177 = sbr.rel (%p174) target = $region12
      $region11: #{tpu_custom_call.1} parent=5 // pred_region
        %s178 = ssub.s32 %s14, 1
        // Predicated region
        $region13: #{tpu_custom_call.1} parent=11 // pred_check
          %p179 = pneg %p73
        $region14: #{tpu_custom_call.1} parent=11 // pred_check_branch
          %181 = sbr.rel (%p179) target = $region16
        $region15: #{tpu_custom_call.1} parent=11 // pred_region
          _
        $region16: #{tpu_custom_call.1} parent=11 // pred_fallthru
          _
        // Predicated region
        $region17: #{tpu_custom_call.1} parent=11 // pred_check
          %p182 = pneg %p94
        $region18: #{tpu_custom_call.1} parent=11 // pred_check_branch
          %184 = sbr.rel (%p182) target = $region20
        $region19: #{tpu_custom_call.1} parent=11 // pred_region
          _
        $region20: #{tpu_custom_call.1} parent=11 // pred_fallthru
          _
        // Predicated region
        $region21: #{tpu_custom_call.1} parent=11 // pred_check
          %p185 = pneg %p115
        $region22: #{tpu_custom_call.1} parent=11 // pred_check_branch
          %187 = sbr.rel (%p185) target = $region24
        $region23: #{tpu_custom_call.1} parent=11 // pred_region
          _
        $region24: #{tpu_custom_call.1} parent=11 // pred_fallthru
          _
        // Predicated region
        $region25: #{tpu_custom_call.1} parent=11 // pred_check
          %p188 = pneg %p136
        $region26: #{tpu_custom_call.1} parent=11 // pred_check_branch
          %190 = sbr.rel (%p188) target = $region28
        $region27: #{tpu_custom_call.1} parent=11 // pred_region
          _
        $region28: #{tpu_custom_call.1} parent=11 // pred_fallthru
          _
      $region12: #{tpu_custom_call.1} parent=5 // pred_fallthru
        _
      %p191 = scmp.lt.s32.totalorder %s14, 2
      // Predicated region
      $region29: #{tpu_custom_call.1} parent=5 // pred_check
        %p192 = pneg %p191
      $region30: #{tpu_custom_call.1} parent=5 // pred_check_branch
        %194 = sbr.rel (%p192) target = $region32
      $region31: #{tpu_custom_call.1} parent=5 // pred_region
        // Predicated region
        $region33: #{tpu_custom_call.1} parent=31 // pred_check
          %p195 = pneg %p46
        $region34: #{tpu_custom_call.1} parent=31 // pred_check_branch
          %197 = sbr.rel (%p195) target = $region36
        $region35: #{tpu_custom_call.1} parent=31 // pred_region
          %p198 = scmp.lt.s32.totalorder %s21, 1
          %s199 = scalar_select %p198, %s21, 1
          %s200 = smul.addr %s199, 2
          %s201 = smul.addr %s200, 4
          %s202 = scalar_lea.vmem %s0, %s201
        $region36: #{tpu_custom_call.1} parent=31 // pred_fallthru
          _
      $region32: #{tpu_custom_call.1} parent=5 // pred_fallthru
        _
      %p203 = scmp.le.s32.totalorder 1, %s14
      %p204 = scmp.lt.s32.totalorder %s14, 3
      %p205 = pnand %p203, %p204
      %p206 = pneg %p205
      // Predicated region
      $region37: #{tpu_custom_call.1} parent=5 // pred_check
        _
      $region38: #{tpu_custom_call.1} parent=5 // pred_check_branch
        %208 = sbr.rel (%p205) target = $region40
      $region39: #{tpu_custom_call.1} parent=5 // pred_region
        %s209 = ssub.s32 %s14, 1
        %p210 = scmp.lt.s32.totalorder %s23, 1
        %s211 = scalar_select %p210, %s23, 1
        %s212 = smul.addr %s211, 2
        %s213 = smul.addr %s212, 4
        %s214 = scalar_lea.vmem %s0, %s213
        %p215 = pneg %p52
        %p216 = pneg %p49
        %p217 = pneg %p73
        %p218 = pneg %p70
        %p219 = pneg %p94
        %p220 = pneg %p91
        %p221 = pneg %p115
        %p222 = pneg %p112
        %p223 = pneg %p136
        %p224 = pneg %p133
        %p225 = pneg %p164
        %p226 = pneg %p161
        %s227 = sand.u32 %s151, 1
        %s228 = scalar_lea.sflag [#allocation4], %s227
        %s229 = sand.u32 %s151, 1
        %s230 = smul.addr %s229, 16
        %s231 = scalar_lea.vmem [#allocation3], %s230
        %p232 = scmp.lt.s32.totalorder %s23, 1
        %s233 = scalar_select %p232, %s23, 1
        %s234 = smul.addr %s233, 2
        %s235 = smul.addr %s234, 4
        %s236 = scalar_lea.vmem %s0, %s235
        %s237 = smul.u32 2, %s24
        %p238 = scmp.eq.s32.totalorder %s24, 0
        // Predicated region
        $region41: #{tpu_custom_call.1} parent=39 // pred_check
          %p239 = pneg %p238
        $region42: #{tpu_custom_call.1} parent=39 // pred_check_branch
          %241 = sbr.rel (%p239) target = $region44
        $region43: #{tpu_custom_call.1} parent=39 // pred_region
          %vm242 = vcmask 146432
          %243 = vst.msk [vmem:[#allocation2] sm:$0xff] %vm242, 0.0
          %244 = vst.msk [vmem:[#allocation2 + $0x8] sm:$0xff] %vm242, 0.0
          %vm245 = vcmask 140288
          %246 = vst.msk [vmem:[#allocation2 + $0x10] sm:$0x3] %vm245, 0.0
          %247 = vst.msk [vmem:[#allocation2 + $0x18] sm:$0xff] %vm242, 0.0
          %248 = vst.msk [vmem:[#allocation2 + $0x20] sm:$0xff] %vm242, 0.0
          %249 = vst.msk [vmem:[#allocation2 + $0x28] sm:$0x3] %vm245, 0.0
          %v250 = vld [vmem:[%s236] sm:$0xff]
          %v251 = vld [vmem:[%s1] sm:$0x3]
          %v253 = vcombine.high %v250, %v250
          %vm254 = vcmask 31744
          %v256 = vsel %vm254, %v251, 0
          %vm258 = vcmask 1043456
          %v259 = vsel %vm258, %v250, 0
          %v261 = vsel %vm258, %v253, 0
          %263 = vmatprep.subr.mxu0 %v261
          %264 = vmatpush1.msra.mxu0 %v259
          %265 = vmatprep.subr.mxu0 0.0
          %266 = vmatpush1.msra.mxu0 0.0
          %267 = vmatprep.subr.mxu0 0.0
          %268 = vmatpush1.msra.mxu0 0.0
          %269 = vmatprep.subr.mxu0 0.0
          %270 = vmatpush1.msra.mxu0 0.0
          %271 = vmatprep.subr.mxu0 0.0
          %272 = vmatpush1.msra.mxu0 0.0
          %273 = vmatprep.subr.mxu0 0.0
          %274 = vmatpush1.msra.mxu0 0.0
          %275 = vmatprep.subr.mxu0 0.0
          %276 = vmatpush1.msra.mxu0 0.0
          %277 = vmatprep.subr.mxu0 0.0
          %278 = vmatpush1.msra.mxu0 0.0
          %279 = vmatprep.subr.mxu0 0.0
          %280 = vmatpush1.msra.mxu0 0.0
          %281 = vmatprep.subr.mxu0 0.0
          %282 = vmatpush1.msra.mxu0 0.0
          %283 = vmatprep.subr.mxu0 0.0
          %284 = vmatpush1.msra.mxu0 0.0
          %285 = vmatprep.subr.mxu0 0.0
          %286 = vmatpush1.msra.mxu0 0.0
          %287 = vmatprep.subr.mxu0 0.0
          %288 = vmatpush1.msra.mxu0 0.0
          %289 = vmatprep.subr.mxu0 0.0
          %290 = vmatpush1.msra.mxu0 0.0
          %291 = vmatprep.subr.mxu0 0.0
          %292 = vmatpush1.msra.mxu0 0.0
          %293 = vmatprep.subr.mxu0 0.0
          %294 = vmatpush1.msra.mxu0 0.0
          %295 = vmatprep.subr.mxu0 0.0
          %296 = vmatpush1.msra.mxu0 0.0
          %297 = vmatprep.subr.mxu0 0.0
          %298 = vmatpush1.msra.mxu0 0.0
          %299 = vmatprep.subr.mxu0 0.0
          %300 = vmatpush1.msra.mxu0 0.0
          %301 = vmatprep.subr.mxu0 0.0
          %302 = vmatpush1.msra.mxu0 0.0
          %303 = vmatprep.subr.mxu0 0.0
          %304 = vmatpush1.msra.mxu0 0.0
          %305 = vmatprep.subr.mxu0 0.0
          %306 = vmatpush1.msra.mxu0 0.0
          %307 = vmatprep.subr.mxu0 0.0
          %308 = vmatpush1.msra.mxu0 0.0
          %309 = vmatprep.subr.mxu0 0.0
          %310 = vmatpush1.msra.mxu0 0.0
          %311 = vmatprep.subr.mxu0 0.0
          %312 = vmatpush1.msra.mxu0 0.0
          %313 = vmatprep.subr.mxu0 0.0
          %314 = vmatpush1.msra.mxu0 0.0
          %315 = vmatprep.subr.mxu0 0.0
          %316 = vmatpush1.msra.mxu0 0.0
          %317 = vmatprep.subr.mxu0 0.0
          %318 = vmatpush1.msra.mxu0 0.0
          %319 = vmatprep.subr.mxu0 0.0
          %320 = vmatpush1.msra.mxu0 0.0
          %321 = vmatprep.subr.mxu0 0.0
          %322 = vmatpush1.msra.mxu0 0.0
          %323 = vmatprep.subr.mxu0 0.0
          %324 = vmatpush1.msra.mxu0 0.0
          %325 = vmatprep.subr.mxu0 0.0
          %326 = vmatpush1.msra.mxu0 0.0
          %327 = vmatprep.mubr.f32.mxu0 0.0
          %328 = vmatmul.mubr.f32.gmra.mrb[0].mxu0 %v256
          %v329 = vpop.f32.mrb[0].mxu0
          %v330 = vadd.f32 0.0, %v329
          %v331 = vpop.f32.mrb[0].mxu0
          %v332 = vadd.f32 0.0, %v331
          %333 = vdwg.mxu0
          %335 = vrot.lane.b32.xlu0 %v330, 112
          %v336 = vpop.permute.xlu0 %335
          %338 = vrot.lane.b32.xlu0 %v330, 96
          %v339 = vpop.permute.xlu0 %338
          %341 = vrot.lane.b32.xlu0 %v330, 80
          %v342 = vpop.permute.xlu0 %341
          %344 = vrot.lane.b32.xlu0 %v330, 64
          %v345 = vpop.permute.xlu0 %344
          %347 = vrot.lane.b32.xlu0 %v330, 48
          %v348 = vpop.permute.xlu0 %347
          %350 = vrot.lane.b32.xlu0 %v330, 32
          %v351 = vpop.permute.xlu0 %350
          %353 = vrot.lane.b32.xlu0 %v330, 16
          %v354 = vpop.permute.xlu0 %353
          %357 = vrot.lane.b32.xlu0 %v332, 112
          %v358 = vpop.permute.xlu0 %357
          %360 = vrot.lane.b32.xlu0 %v332, 96
          %v361 = vpop.permute.xlu0 %360
          %363 = vrot.lane.b32.xlu0 %v332, 80
          %v364 = vpop.permute.xlu0 %363
          %366 = vrot.lane.b32.xlu0 %v332, 64
          %v367 = vpop.permute.xlu0 %366
          %369 = vrot.lane.b32.xlu0 %v332, 48
          %v370 = vpop.permute.xlu0 %369
          %372 = vrot.lane.b32.xlu0 %v332, 32
          %v373 = vpop.permute.xlu0 %372
          %375 = vrot.lane.b32.xlu0 %v332, 16
          %v376 = vpop.permute.xlu0 %375
          %v378 = vcombine.low %v330, %v339
          %v380 = vunpack.c.l.s4 1983009808
          %v381 = vunpack.c.0.s8 %v380
          %v382 = vlaneseq
          %v383 = vshrl.u32 %v382, 7
          %v384 = vsub.s32 %v381, %v383
          %v385 = vrot.slane %v378, %v384
          %v386 = vcombine.low %v336, %v342
          %v388 = vunpack.c.l.s4 1983009808
          %v389 = vunpack.c.0.s8 %v388
          %v390 = vlaneseq
          %v391 = vshrl.u32 %v390, 7
          %v392 = vsub.s32 %v389, %v391
          %v393 = vrot.slane %v386, %v392
          %v394 = vcombine.low %v345, %v351
          %v396 = vunpack.c.l.s4 1983009808
          %v397 = vunpack.c.0.s8 %v396
          %v398 = vlaneseq
          %v399 = vshrl.u32 %v398, 7
          %v400 = vsub.s32 %v397, %v399
          %v401 = vrot.slane %v394, %v400
          %v402 = vcombine.low %v348, %v354
          %v404 = vunpack.c.l.s4 1983009808
          %v405 = vunpack.c.0.s8 %v404
          %v406 = vlaneseq
          %v407 = vshrl.u32 %v406, 7
          %v408 = vsub.s32 %v405, %v407
          %v409 = vrot.slane %v402, %v408
          %v410 = vcombine.low %v385, %v393
          %v412 = vunpack.c.l.s4 1934713408
          %v413 = vunpack.c.0.s8 %v412
          %v414 = vlaneseq
          %v415 = vshrl.u32 %v414, 7
          %v416 = vsub.s32 %v413, %v415
          %v417 = vrot.slane %v410, %v416
          %v418 = vcombine.low %v401, %v409
          %v420 = vunpack.c.l.s4 1934713408
          %v421 = vunpack.c.0.s8 %v420
          %v422 = vlaneseq
          %v423 = vshrl.u32 %v422, 7
          %v424 = vsub.s32 %v421, %v423
          %v425 = vrot.slane %v418, %v424
          %v426 = vcombine.low %v417, %v425
          %v427 = vcombine.high %v417, %v425
          %v428 = vcombine.low %v332, %v361
          %v430 = vunpack.c.l.s4 1983009808
          %v431 = vunpack.c.0.s8 %v430
          %v432 = vlaneseq
          %v433 = vshrl.u32 %v432, 7
          %v434 = vsub.s32 %v431, %v433
          %v435 = vrot.slane %v428, %v434
          %v436 = vcombine.low %v358, %v364
          %v438 = vunpack.c.l.s4 1983009808
          %v439 = vunpack.c.0.s8 %v438
          %v440 = vlaneseq
          %v441 = vshrl.u32 %v440, 7
          %v442 = vsub.s32 %v439, %v441
          %v443 = vrot.slane %v436, %v442
          %v444 = vcombine.low %v367, %v373
          %v446 = vunpack.c.l.s4 1983009808
          %v447 = vunpack.c.0.s8 %v446
          %v448 = vlaneseq
          %v449 = vshrl.u32 %v448, 7
          %v450 = vsub.s32 %v447, %v449
          %v451 = vrot.slane %v444, %v450
          %v452 = vcombine.low %v370, %v376
          %v454 = vunpack.c.l.s4 1983009808
          %v455 = vunpack.c.0.s8 %v454
          %v456 = vlaneseq
          %v457 = vshrl.u32 %v456, 7
          %v458 = vsub.s32 %v455, %v457
          %v459 = vrot.slane %v452, %v458
          %v460 = vcombine.low %v435, %v443
          %v462 = vunpack.c.l.s4 1934713408
          %v463 = vunpack.c.0.s8 %v462
          %v464 = vlaneseq
          %v465 = vshrl.u32 %v464, 7
          %v466 = vsub.s32 %v463, %v465
          %v467 = vrot.slane %v460, %v466
          %v468 = vcombine.low %v451, %v459
          %v470 = vunpack.c.l.s4 1934713408
          %v471 = vunpack.c.0.s8 %v470
          %v472 = vlaneseq
          %v473 = vshrl.u32 %v472, 7
          %v474 = vsub.s32 %v471, %v473
          %v475 = vrot.slane %v468, %v474
          %v476 = vcombine.low %v467, %v475
          %v477 = vcombine.high %v467, %v475
          %482 = vrot.lane.b32.xlu0 %v426, 1
          %v483 = vpop.permute.xlu0 %482
          %484 = vrot.lane.b32.xlu0 %v476, 1
          %v485 = vpop.permute.xlu0 %484
          %486 = vrot.lane.b32.xlu0 %v427, 1
          %v487 = vpop.permute.xlu0 %486
          %488 = vrot.lane.b32.xlu0 %v477, 1
          %v489 = vpop.permute.xlu0 %488
          %vm494 = vcmask 138248
          %495 = vst.msk [vmem:[#allocation2 + $0x1] sm:$0xff] %vm494, %v483
          %496 = vst.msk [vmem:[#allocation2 + $0x9] sm:$0xff] %vm494, %v485
          %497 = vst.msk [vmem:[#allocation2 + $0x19] sm:$0xff] %vm494, %v487
          %498 = vst.msk [vmem:[#allocation2 + $0x21] sm:$0xff] %vm494, %v489
        $region44: #{tpu_custom_call.1} parent=39 // pred_fallthru
          _
        %v499 = vld [vmem:[#allocation2] sm:$0xff]
        %v500 = vld [vmem:[#allocation2 + $0x8] sm:$0xff]
        %v501 = vld [vmem:[#allocation2 + $0x10] sm:$0x3]
        %v502 = vld [vmem:[#allocation2 + $0x18] sm:$0xff]
        %v503 = vld [vmem:[#allocation2 + $0x20] sm:$0xff]
        %v504 = vld [vmem:[#allocation2 + $0x28] sm:$0x3]
        %509 = vrot.lane.b32.xlu0 %v499, 127
        %v510 = vpop.permute.xlu0 %509
        %511 = vrot.lane.b32.xlu0 %v500, 127
        %v512 = vpop.permute.xlu0 %511
        %513 = vrot.lane.b32.xlu0 %v502, 127
        %v514 = vpop.permute.xlu0 %513
        %515 = vrot.lane.b32.xlu0 %v503, 127
        %v516 = vpop.permute.xlu0 %515
        %521 = vrot.lane.b32.xlu0 %v499, 126
        %v522 = vpop.permute.xlu0 %521
        %523 = vrot.lane.b32.xlu0 %v500, 126
        %v524 = vpop.permute.xlu0 %523
        %525 = vrot.lane.b32.xlu0 %v502, 126
        %v526 = vpop.permute.xlu0 %525
        %527 = vrot.lane.b32.xlu0 %v503, 126
        %v528 = vpop.permute.xlu0 %527
        %vm535 = vcmask 1046528
        %v536 = vrot.slane %v499, 1
        %v537 = vrot.slane %v500, 1
        %v538 = vsel %vm535, %v536, %v537
        %v539 = vrot.slane %v501, 1
        %v540 = vsel %vm535, %v537, %v539
        %v541 = vrot.slane %v502, 1
        %v542 = vrot.slane %v503, 1
        %v543 = vsel %vm535, %v541, %v542
        %v544 = vrot.slane %v504, 1
        %v545 = vsel %vm535, %v542, %v544
        %550 = vrot.lane.b32.xlu0 %v538, 127
        %v551 = vpop.permute.xlu0 %550
        %552 = vrot.lane.b32.xlu0 %v540, 127
        %v553 = vpop.permute.xlu0 %552
        %554 = vrot.lane.b32.xlu0 %v543, 127
        %v555 = vpop.permute.xlu0 %554
        %556 = vrot.lane.b32.xlu0 %v545, 127
        %v557 = vpop.permute.xlu0 %556
        %562 = vrot.lane.b32.xlu0 %v538, 126
        %v563 = vpop.permute.xlu0 %562
        %564 = vrot.lane.b32.xlu0 %v540, 126
        %v565 = vpop.permute.xlu0 %564
        %566 = vrot.lane.b32.xlu0 %v543, 126
        %v567 = vpop.permute.xlu0 %566
        %568 = vrot.lane.b32.xlu0 %v545, 126
        %v569 = vpop.permute.xlu0 %568
        %vm574 = vcmask 1045504
        %v575 = vrot.slane %v499, 2
        %v576 = vrot.slane %v500, 2
        %v577 = vsel %vm574, %v575, %v576
        %v578 = vrot.slane %v501, 2
        %v579 = vsel %vm574, %v576, %v578
        %v580 = vrot.slane %v502, 2
        %v581 = vrot.slane %v503, 2
        %v582 = vsel %vm574, %v580, %v581
        %v583 = vrot.slane %v504, 2
        %v584 = vsel %vm574, %v581, %v583
        %589 = vrot.lane.b32.xlu0 %v577, 127
        %v590 = vpop.permute.xlu0 %589
        %591 = vrot.lane.b32.xlu0 %v579, 127
        %v592 = vpop.permute.xlu0 %591
        %593 = vrot.lane.b32.xlu0 %v582, 127
        %v594 = vpop.permute.xlu0 %593
        %595 = vrot.lane.b32.xlu0 %v584, 127
        %v596 = vpop.permute.xlu0 %595
        %601 = vrot.lane.b32.xlu0 %v577, 126
        %v602 = vpop.permute.xlu0 %601
        %603 = vrot.lane.b32.xlu0 %v579, 126
        %v604 = vpop.permute.xlu0 %603
        %605 = vrot.lane.b32.xlu0 %v582, 126
        %v606 = vpop.permute.xlu0 %605
        %607 = vrot.lane.b32.xlu0 %v584, 126
        %v608 = vpop.permute.xlu0 %607
        %v613 = vcombine.low %v499, %v510
        %v614 = vcombine.high %v499, %v510
        %v616 = vunpack.c.l.s4 1983009808
        %v617 = vunpack.c.0.s8 %v616
        %v618 = vlaneseq
        %v619 = vshrl.u32 %v618, 7
        %v620 = vsub.s32 %v617, %v619
        %v621 = vrot.slane %v613, %v620
        %v623 = vunpack.c.l.s4 1983009808
        %v624 = vunpack.c.0.s8 %v623
        %v625 = vlaneseq
        %v626 = vshrl.u32 %v625, 7
        %v627 = vsub.s32 %v624, %v626
        %v628 = vrot.slane %v614, %v627
        %v629 = vcombine.low %v502, %v514
        %v630 = vcombine.high %v502, %v514
        %v632 = vunpack.c.l.s4 1983009808
        %v633 = vunpack.c.0.s8 %v632
        %v634 = vlaneseq
        %v635 = vshrl.u32 %v634, 7
        %v636 = vsub.s32 %v633, %v635
        %v637 = vrot.slane %v629, %v636
        %v639 = vunpack.c.l.s4 1983009808
        %v640 = vunpack.c.0.s8 %v639
        %v641 = vlaneseq
        %v642 = vshrl.u32 %v641, 7
        %v643 = vsub.s32 %v640, %v642
        %v644 = vrot.slane %v630, %v643
        %v645 = vcombine.low %v522, %v538
        %v646 = vcombine.high %v522, %v538
        %v648 = vunpack.c.l.s4 1983009808
        %v649 = vunpack.c.0.s8 %v648
        %v650 = vlaneseq
        %v651 = vshrl.u32 %v650, 7
        %v652 = vsub.s32 %v649, %v651
        %v653 = vrot.slane %v645, %v652
        %v655 = vunpack.c.l.s4 1983009808
        %v656 = vunpack.c.0.s8 %v655
        %v657 = vlaneseq
        %v658 = vshrl.u32 %v657, 7
        %v659 = vsub.s32 %v656, %v658
        %v660 = vrot.slane %v646, %v659
        %v661 = vcombine.low %v526, %v543
        %v662 = vcombine.high %v526, %v543
        %v664 = vunpack.c.l.s4 1983009808
        %v665 = vunpack.c.0.s8 %v664
        %v666 = vlaneseq
        %v667 = vshrl.u32 %v666, 7
        %v668 = vsub.s32 %v665, %v667
        %v669 = vrot.slane %v661, %v668
        %v671 = vunpack.c.l.s4 1983009808
        %v672 = vunpack.c.0.s8 %v671
        %v673 = vlaneseq
        %v674 = vshrl.u32 %v673, 7
        %v675 = vsub.s32 %v672, %v674
        %v676 = vrot.slane %v662, %v675
        %v677 = vcombine.low %v621, %v637
        %v678 = vcombine.high %v621, %v637
        %v680 = vunpack.c.l.s4 1934713408
        %v681 = vunpack.c.0.s8 %v680
        %v682 = vlaneseq
        %v683 = vshrl.u32 %v682, 7
        %v684 = vsub.s32 %v681, %v683
        %v685 = vrot.slane %v677, %v684
        %v687 = vunpack.c.l.s4 1934713408
        %v688 = vunpack.c.0.s8 %v687
        %v689 = vlaneseq
        %v690 = vshrl.u32 %v689, 7
        %v691 = vsub.s32 %v688, %v690
        %v692 = vrot.slane %v678, %v691
        %v693 = vcombine.low %v628, %v644
        %v694 = vcombine.high %v628, %v644
        %v696 = vunpack.c.l.s4 1934713408
        %v697 = vunpack.c.0.s8 %v696
        %v698 = vlaneseq
        %v699 = vshrl.u32 %v698, 7
        %v700 = vsub.s32 %v697, %v699
        %v701 = vrot.slane %v693, %v700
        %v703 = vunpack.c.l.s4 1934713408
        %v704 = vunpack.c.0.s8 %v703
        %v705 = vlaneseq
        %v706 = vshrl.u32 %v705, 7
        %v707 = vsub.s32 %v704, %v706
        %v708 = vrot.slane %v694, %v707
        %v709 = vcombine.low %v653, %v669
        %v710 = vcombine.high %v653, %v669
        %v712 = vunpack.c.l.s4 1934713408
        %v713 = vunpack.c.0.s8 %v712
        %v714 = vlaneseq
        %v715 = vshrl.u32 %v714, 7
        %v716 = vsub.s32 %v713, %v715
        %v717 = vrot.slane %v709, %v716
        %v719 = vunpack.c.l.s4 1934713408
        %v720 = vunpack.c.0.s8 %v719
        %v721 = vlaneseq
        %v722 = vshrl.u32 %v721, 7
        %v723 = vsub.s32 %v720, %v722
        %v724 = vrot.slane %v710, %v723
        %v725 = vcombine.low %v660, %v676
        %v726 = vcombine.high %v660, %v676
        %v728 = vunpack.c.l.s4 1934713408
        %v729 = vunpack.c.0.s8 %v728
        %v730 = vlaneseq
        %v731 = vshrl.u32 %v730, 7
        %v732 = vsub.s32 %v729, %v731
        %v733 = vrot.slane %v725, %v732
        %v735 = vunpack.c.l.s4 1934713408
        %v736 = vunpack.c.0.s8 %v735
        %v737 = vlaneseq
        %v738 = vshrl.u32 %v737, 7
        %v739 = vsub.s32 %v736, %v738
        %v740 = vrot.slane %v726, %v739
        %v741 = vcombine.low %v685, %v717
        %v742 = vcombine.high %v685, %v717
        %v743 = vcombine.low %v692, %v724
        %v744 = vcombine.high %v692, %v724
        %v745 = vcombine.low %v701, %v733
        %v746 = vcombine.high %v701, %v733
        %v747 = vcombine.low %v708, %v740
        %v748 = vcombine.high %v708, %v740
        %v749 = vcombine.low %v551, %v563
        %v750 = vcombine.high %v551, %v563
        %v752 = vunpack.c.l.s4 1983009808
        %v753 = vunpack.c.0.s8 %v752
        %v754 = vlaneseq
        %v755 = vshrl.u32 %v754, 7
        %v756 = vsub.s32 %v753, %v755
        %v757 = vrot.slane %v749, %v756
        %v759 = vunpack.c.l.s4 1983009808
        %v760 = vunpack.c.0.s8 %v759
        %v761 = vlaneseq
        %v762 = vshrl.u32 %v761, 7
        %v763 = vsub.s32 %v760, %v762
        %v764 = vrot.slane %v750, %v763
        %v765 = vcombine.low %v555, %v567
        %v766 = vcombine.high %v555, %v567
        %v768 = vunpack.c.l.s4 1983009808
        %v769 = vunpack.c.0.s8 %v768
        %v770 = vlaneseq
        %v771 = vshrl.u32 %v770, 7
        %v772 = vsub.s32 %v769, %v771
        %v773 = vrot.slane %v765, %v772
        %v775 = vunpack.c.l.s4 1983009808
        %v776 = vunpack.c.0.s8 %v775
        %v777 = vlaneseq
        %v778 = vshrl.u32 %v777, 7
        %v779 = vsub.s32 %v776, %v778
        %v780 = vrot.slane %v766, %v779
        %v781 = vcombine.low %v577, %v590
        %v782 = vcombine.high %v577, %v590
        %v784 = vunpack.c.l.s4 1983009808
        %v785 = vunpack.c.0.s8 %v784
        %v786 = vlaneseq
        %v787 = vshrl.u32 %v786, 7
        %v788 = vsub.s32 %v785, %v787
        %v789 = vrot.slane %v781, %v788
        %v791 = vunpack.c.l.s4 1983009808
        %v792 = vunpack.c.0.s8 %v791
        %v793 = vlaneseq
        %v794 = vshrl.u32 %v793, 7
        %v795 = vsub.s32 %v792, %v794
        %v796 = vrot.slane %v782, %v795
        %v797 = vcombine.low %v582, %v594
        %v798 = vcombine.high %v582, %v594
        %v800 = vunpack.c.l.s4 1983009808
        %v801 = vunpack.c.0.s8 %v800
        %v802 = vlaneseq
        %v803 = vshrl.u32 %v802, 7
        %v804 = vsub.s32 %v801, %v803
        %v805 = vrot.slane %v797, %v804
        %v807 = vunpack.c.l.s4 1983009808
        %v808 = vunpack.c.0.s8 %v807
        %v809 = vlaneseq
        %v810 = vshrl.u32 %v809, 7
        %v811 = vsub.s32 %v808, %v810
        %v812 = vrot.slane %v798, %v811
        %v813 = vcombine.low %v757, %v773
        %v814 = vcombine.high %v757, %v773
        %v816 = vunpack.c.l.s4 1934713408
        %v817 = vunpack.c.0.s8 %v816
        %v818 = vlaneseq
        %v819 = vshrl.u32 %v818, 7
        %v820 = vsub.s32 %v817, %v819
        %v821 = vrot.slane %v813, %v820
        %v823 = vunpack.c.l.s4 1934713408
        %v824 = vunpack.c.0.s8 %v823
        %v825 = vlaneseq
        %v826 = vshrl.u32 %v825, 7
        %v827 = vsub.s32 %v824, %v826
        %v828 = vrot.slane %v814, %v827
        %v829 = vcombine.low %v764, %v780
        %v830 = vcombine.high %v764, %v780
        %v832 = vunpack.c.l.s4 1934713408
        %v833 = vunpack.c.0.s8 %v832
        %v834 = vlaneseq
        %v835 = vshrl.u32 %v834, 7
        %v836 = vsub.s32 %v833, %v835
        %v837 = vrot.slane %v829, %v836
        %v839 = vunpack.c.l.s4 1934713408
        %v840 = vunpack.c.0.s8 %v839
        %v841 = vlaneseq
        %v842 = vshrl.u32 %v841, 7
        %v843 = vsub.s32 %v840, %v842
        %v844 = vrot.slane %v830, %v843
        %v845 = vcombine.low %v789, %v805
        %v846 = vcombine.high %v789, %v805
        %v848 = vunpack.c.l.s4 1934713408
        %v849 = vunpack.c.0.s8 %v848
        %v850 = vlaneseq
        %v851 = vshrl.u32 %v850, 7
        %v852 = vsub.s32 %v849, %v851
        %v853 = vrot.slane %v845, %v852
        %v855 = vunpack.c.l.s4 1934713408
        %v856 = vunpack.c.0.s8 %v855
        %v857 = vlaneseq
        %v858 = vshrl.u32 %v857, 7
        %v859 = vsub.s32 %v856, %v858
        %v860 = vrot.slane %v846, %v859
        %v861 = vcombine.low %v796, %v812
        %v862 = vcombine.high %v796, %v812
        %v864 = vunpack.c.l.s4 1934713408
        %v865 = vunpack.c.0.s8 %v864
        %v866 = vlaneseq
        %v867 = vshrl.u32 %v866, 7
        %v868 = vsub.s32 %v865, %v867
        %v869 = vrot.slane %v861, %v868
        %v871 = vunpack.c.l.s4 1934713408
        %v872 = vunpack.c.0.s8 %v871
        %v873 = vlaneseq
        %v874 = vshrl.u32 %v873, 7
        %v875 = vsub.s32 %v872, %v874
        %v876 = vrot.slane %v862, %v875
        %v877 = vcombine.low %v821, %v853
        %v878 = vcombine.high %v821, %v853
        %v879 = vcombine.low %v828, %v860
        %v880 = vcombine.high %v828, %v860
        %v881 = vcombine.low %v837, %v869
        %v882 = vcombine.high %v837, %v869
        %v883 = vcombine.low %v844, %v876
        %v884 = vcombine.high %v844, %v876
        %v885 = vcombine.high %v602, 0.0
        %v887 = vunpack.c.l.s4 1983009808
        %v888 = vunpack.c.0.s8 %v887
        %v889 = vlaneseq
        %v890 = vshrl.u32 %v889, 7
        %v891 = vsub.s32 %v888, %v890
        %v892 = vrot.slane %v602, %v891
        %v894 = vunpack.c.l.s4 1983009808
        %v895 = vunpack.c.0.s8 %v894
        %v896 = vlaneseq
        %v897 = vshrl.u32 %v896, 7
        %v898 = vsub.s32 %v895, %v897
        %v899 = vrot.slane %v885, %v898
        %v900 = vcombine.high %v606, 0.0
        %v902 = vunpack.c.l.s4 1983009808
        %v903 = vunpack.c.0.s8 %v902
        %v904 = vlaneseq
        %v905 = vshrl.u32 %v904, 7
        %v906 = vsub.s32 %v903, %v905
        %v907 = vrot.slane %v606, %v906
        %v909 = vunpack.c.l.s4 1983009808
        %v910 = vunpack.c.0.s8 %v909
        %v911 = vlaneseq
        %v912 = vshrl.u32 %v911, 7
        %v913 = vsub.s32 %v910, %v912
        %v914 = vrot.slane %v900, %v913
        %v915 = vcombine.low %v892, %v907
        %v916 = vcombine.high %v892, %v907
        %v918 = vunpack.c.l.s4 1934713408
        %v919 = vunpack.c.0.s8 %v918
        %v920 = vlaneseq
        %v921 = vshrl.u32 %v920, 7
        %v922 = vsub.s32 %v919, %v921
        %v923 = vrot.slane %v915, %v922
        %v925 = vunpack.c.l.s4 1934713408
        %v926 = vunpack.c.0.s8 %v925
        %v927 = vlaneseq
        %v928 = vshrl.u32 %v927, 7
        %v929 = vsub.s32 %v926, %v928
        %v930 = vrot.slane %v916, %v929
        %v931 = vcombine.low %v899, %v914
        %v932 = vcombine.high %v899, %v914
        %v934 = vunpack.c.l.s4 1934713408
        %v935 = vunpack.c.0.s8 %v934
        %v936 = vlaneseq
        %v937 = vshrl.u32 %v936, 7
        %v938 = vsub.s32 %v935, %v937
        %v939 = vrot.slane %v931, %v938
        %v941 = vunpack.c.l.s4 1934713408
        %v942 = vunpack.c.0.s8 %v941
        %v943 = vlaneseq
        %v944 = vshrl.u32 %v943, 7
        %v945 = vsub.s32 %v942, %v944
        %v946 = vrot.slane %v932, %v945
        %v947 = vcombine.high %v923, 0.0
        %v948 = vcombine.high %v930, 0.0
        %v949 = vcombine.high %v939, 0.0
        %v950 = vcombine.high %v946, 0.0
        %v951 = vcombine.low %v500, %v512
        %v952 = vcombine.high %v500, %v512
        %v954 = vunpack.c.l.s4 1983009808
        %v955 = vunpack.c.0.s8 %v954
        %v956 = vlaneseq
        %v957 = vshrl.u32 %v956, 7
        %v958 = vsub.s32 %v955, %v957
        %v959 = vrot.slane %v951, %v958
        %v961 = vunpack.c.l.s4 1983009808
        %v962 = vunpack.c.0.s8 %v961
        %v963 = vlaneseq
        %v964 = vshrl.u32 %v963, 7
        %v965 = vsub.s32 %v962, %v964
        %v966 = vrot.slane %v952, %v965
        %v967 = vcombine.low %v503, %v516
        %v968 = vcombine.high %v503, %v516
        %v970 = vunpack.c.l.s4 1983009808
        %v971 = vunpack.c.0.s8 %v970
        %v972 = vlaneseq
        %v973 = vshrl.u32 %v972, 7
        %v974 = vsub.s32 %v971, %v973
        %v975 = vrot.slane %v967, %v974
        %v977 = vunpack.c.l.s4 1983009808
        %v978 = vunpack.c.0.s8 %v977
        %v979 = vlaneseq
        %v980 = vshrl.u32 %v979, 7
        %v981 = vsub.s32 %v978, %v980
        %v982 = vrot.slane %v968, %v981
        %v983 = vcombine.low %v524, %v540
        %v984 = vcombine.high %v524, %v540
        %v986 = vunpack.c.l.s4 1983009808
        %v987 = vunpack.c.0.s8 %v986
        %v988 = vlaneseq
        %v989 = vshrl.u32 %v988, 7
        %v990 = vsub.s32 %v987, %v989
        %v991 = vrot.slane %v983, %v990
        %v993 = vunpack.c.l.s4 1983009808
        %v994 = vunpack.c.0.s8 %v993
        %v995 = vlaneseq
        %v996 = vshrl.u32 %v995, 7
        %v997 = vsub.s32 %v994, %v996
        %v998 = vrot.slane %v984, %v997
        %v999 = vcombine.low %v528, %v545
        %v1000 = vcombine.high %v528, %v545
        %v1002 = vunpack.c.l.s4 1983009808
        %v1003 = vunpack.c.0.s8 %v1002
        %v1004 = vlaneseq
        %v1005 = vshrl.u32 %v1004, 7
        %v1006 = vsub.s32 %v1003, %v1005
        %v1007 = vrot.slane %v999, %v1006
        %v1009 = vunpack.c.l.s4 1983009808
        %v1010 = vunpack.c.0.s8 %v1009
        %v1011 = vlaneseq
        %v1012 = vshrl.u32 %v1011, 7
        %v1013 = vsub.s32 %v1010, %v1012
        %v1014 = vrot.slane %v1000, %v1013
        %v1015 = vcombine.low %v959, %v975
        %v1016 = vcombine.high %v959, %v975
        %v1018 = vunpack.c.l.s4 1934713408
        %v1019 = vunpack.c.0.s8 %v1018
        %v1020 = vlaneseq
        %v1021 = vshrl.u32 %v1020, 7
        %v1022 = vsub.s32 %v1019, %v1021
        %v1023 = vrot.slane %v1015, %v1022
        %v1025 = vunpack.c.l.s4 1934713408
        %v1026 = vunpack.c.0.s8 %v1025
        %v1027 = vlaneseq
        %v1028 = vshrl.u32 %v1027, 7
        %v1029 = vsub.s32 %v1026, %v1028
        %v1030 = vrot.slane %v1016, %v1029
        %v1031 = vcombine.low %v966, %v982
        %v1032 = vcombine.high %v966, %v982
        %v1034 = vunpack.c.l.s4 1934713408
        %v1035 = vunpack.c.0.s8 %v1034
        %v1036 = vlaneseq
        %v1037 = vshrl.u32 %v1036, 7
        %v1038 = vsub.s32 %v1035, %v1037
        %v1039 = vrot.slane %v1031, %v1038
        %v1041 = vunpack.c.l.s4 1934713408
        %v1042 = vunpack.c.0.s8 %v1041
        %v1043 = vlaneseq
        %v1044 = vshrl.u32 %v1043, 7
        %v1045 = vsub.s32 %v1042, %v1044
        %v1046 = vrot.slane %v1032, %v1045
        %v1047 = vcombine.low %v991, %v1007
        %v1048 = vcombine.high %v991, %v1007
        %v1050 = vunpack.c.l.s4 1934713408
        %v1051 = vunpack.c.0.s8 %v1050
        %v1052 = vlaneseq
        %v1053 = vshrl.u32 %v1052, 7
        %v1054 = vsub.s32 %v1051, %v1053
        %v1055 = vrot.slane %v1047, %v1054
        %v1057 = vunpack.c.l.s4 1934713408
        %v1058 = vunpack.c.0.s8 %v1057
        %v1059 = vlaneseq
        %v1060 = vshrl.u32 %v1059, 7
        %v1061 = vsub.s32 %v1058, %v1060
        %v1062 = vrot.slane %v1048, %v1061
        %v1063 = vcombine.low %v998, %v1014
        %v1064 = vcombine.high %v998, %v1014
        %v1066 = vunpack.c.l.s4 1934713408
        %v1067 = vunpack.c.0.s8 %v1066
        %v1068 = vlaneseq
        %v1069 = vshrl.u32 %v1068, 7
        %v1070 = vsub.s32 %v1067, %v1069
        %v1071 = vrot.slane %v1063, %v1070
        %v1073 = vunpack.c.l.s4 1934713408
        %v1074 = vunpack.c.0.s8 %v1073
        %v1075 = vlaneseq
        %v1076 = vshrl.u32 %v1075, 7
        %v1077 = vsub.s32 %v1074, %v1076
        %v1078 = vrot.slane %v1064, %v1077
        %v1079 = vcombine.low %v1023, %v1055
        %v1080 = vcombine.high %v1023, %v1055
        %v1081 = vcombine.low %v1030, %v1062
        %v1082 = vcombine.high %v1030, %v1062
        %v1083 = vcombine.low %v1039, %v1071
        %v1084 = vcombine.high %v1039, %v1071
        %v1085 = vcombine.low %v1046, %v1078
        %v1086 = vcombine.high %v1046, %v1078
        %v1087 = vcombine.low %v553, %v565
        %v1088 = vcombine.high %v553, %v565
        %v1090 = vunpack.c.l.s4 1983009808
        %v1091 = vunpack.c.0.s8 %v1090
        %v1092 = vlaneseq
        %v1093 = vshrl.u32 %v1092, 7
        %v1094 = vsub.s32 %v1091, %v1093
        %v1095 = vrot.slane %v1087, %v1094
        %v1097 = vunpack.c.l.s4 1983009808
        %v1098 = vunpack.c.0.s8 %v1097
        %v1099 = vlaneseq
        %v1100 = vshrl.u32 %v1099, 7
        %v1101 = vsub.s32 %v1098, %v1100
        %v1102 = vrot.slane %v1088, %v1101
        %v1103 = vcombine.low %v557, %v569
        %v1104 = vcombine.high %v557, %v569
        %v1106 = vunpack.c.l.s4 1983009808
        %v1107 = vunpack.c.0.s8 %v1106
        %v1108 = vlaneseq
        %v1109 = vshrl.u32 %v1108, 7
        %v1110 = vsub.s32 %v1107, %v1109
        %v1111 = vrot.slane %v1103, %v1110
        %v1113 = vunpack.c.l.s4 1983009808
        %v1114 = vunpack.c.0.s8 %v1113
        %v1115 = vlaneseq
        %v1116 = vshrl.u32 %v1115, 7
        %v1117 = vsub.s32 %v1114, %v1116
        %v1118 = vrot.slane %v1104, %v1117
        %v1119 = vcombine.low %v579, %v592
        %v1120 = vcombine.high %v579, %v592
        %v1122 = vunpack.c.l.s4 1983009808
        %v1123 = vunpack.c.0.s8 %v1122
        %v1124 = vlaneseq
        %v1125 = vshrl.u32 %v1124, 7
        %v1126 = vsub.s32 %v1123, %v1125
        %v1127 = vrot.slane %v1119, %v1126
        %v1129 = vunpack.c.l.s4 1983009808
        %v1130 = vunpack.c.0.s8 %v1129
        %v1131 = vlaneseq
        %v1132 = vshrl.u32 %v1131, 7
        %v1133 = vsub.s32 %v1130, %v1132
        %v1134 = vrot.slane %v1120, %v1133
        %v1135 = vcombine.low %v584, %v596
        %v1136 = vcombine.high %v584, %v596
        %v1138 = vunpack.c.l.s4 1983009808
        %v1139 = vunpack.c.0.s8 %v1138
        %v1140 = vlaneseq
        %v1141 = vshrl.u32 %v1140, 7
        %v1142 = vsub.s32 %v1139, %v1141
        %v1143 = vrot.slane %v1135, %v1142
        %v1145 = vunpack.c.l.s4 1983009808
        %v1146 = vunpack.c.0.s8 %v1145
        %v1147 = vlaneseq
        %v1148 = vshrl.u32 %v1147, 7
        %v1149 = vsub.s32 %v1146, %v1148
        %v1150 = vrot.slane %v1136, %v1149
        %v1151 = vcombine.low %v1095, %v1111
        %v1152 = vcombine.high %v1095, %v1111
        %v1154 = vunpack.c.l.s4 1934713408
        %v1155 = vunpack.c.0.s8 %v1154
        %v1156 = vlaneseq
        %v1157 = vshrl.u32 %v1156, 7
        %v1158 = vsub.s32 %v1155, %v1157
        %v1159 = vrot.slane %v1151, %v1158
        %v1161 = vunpack.c.l.s4 1934713408
        %v1162 = vunpack.c.0.s8 %v1161
        %v1163 = vlaneseq
        %v1164 = vshrl.u32 %v1163, 7
        %v1165 = vsub.s32 %v1162, %v1164
        %v1166 = vrot.slane %v1152, %v1165
        %v1167 = vcombine.low %v1102, %v1118
        %v1168 = vcombine.high %v1102, %v1118
        %v1170 = vunpack.c.l.s4 1934713408
        %v1171 = vunpack.c.0.s8 %v1170
        %v1172 = vlaneseq
        %v1173 = vshrl.u32 %v1172, 7
        %v1174 = vsub.s32 %v1171, %v1173
        %v1175 = vrot.slane %v1167, %v1174
        %v1177 = vunpack.c.l.s4 1934713408
        %v1178 = vunpack.c.0.s8 %v1177
        %v1179 = vlaneseq
        %v1180 = vshrl.u32 %v1179, 7
        %v1181 = vsub.s32 %v1178, %v1180
        %v1182 = vrot.slane %v1168, %v1181
        %v1183 = vcombine.low %v1127, %v1143
        %v1184 = vcombine.high %v1127, %v1143
        %v1186 = vunpack.c.l.s4 1934713408
        %v1187 = vunpack.c.0.s8 %v1186
        %v1188 = vlaneseq
        %v1189 = vshrl.u32 %v1188, 7
        %v1190 = vsub.s32 %v1187, %v1189
        %v1191 = vrot.slane %v1183, %v1190
        %v1193 = vunpack.c.l.s4 1934713408
        %v1194 = vunpack.c.0.s8 %v1193
        %v1195 = vlaneseq
        %v1196 = vshrl.u32 %v1195, 7
        %v1197 = vsub.s32 %v1194, %v1196
        %v1198 = vrot.slane %v1184, %v1197
        %v1199 = vcombine.low %v1134, %v1150
        %v1200 = vcombine.high %v1134, %v1150
        %v1202 = vunpack.c.l.s4 1934713408
        %v1203 = vunpack.c.0.s8 %v1202
        %v1204 = vlaneseq
        %v1205 = vshrl.u32 %v1204, 7
        %v1206 = vsub.s32 %v1203, %v1205
        %v1207 = vrot.slane %v1199, %v1206
        %v1209 = vunpack.c.l.s4 1934713408
        %v1210 = vunpack.c.0.s8 %v1209
        %v1211 = vlaneseq
        %v1212 = vshrl.u32 %v1211, 7
        %v1213 = vsub.s32 %v1210, %v1212
        %v1214 = vrot.slane %v1200, %v1213
        %v1215 = vcombine.low %v1159, %v1191
        %v1216 = vcombine.high %v1159, %v1191
        %v1217 = vcombine.low %v1166, %v1198
        %v1218 = vcombine.high %v1166, %v1198
        %v1219 = vcombine.low %v1175, %v1207
        %v1220 = vcombine.high %v1175, %v1207
        %v1221 = vcombine.low %v1182, %v1214
        %v1222 = vcombine.high %v1182, %v1214
        %v1223 = vcombine.high %v604, 0.0
        %v1225 = vunpack.c.l.s4 1983009808
        %v1226 = vunpack.c.0.s8 %v1225
        %v1227 = vlaneseq
        %v1228 = vshrl.u32 %v1227, 7
        %v1229 = vsub.s32 %v1226, %v1228
        %v1230 = vrot.slane %v604, %v1229
        %v1232 = vunpack.c.l.s4 1983009808
        %v1233 = vunpack.c.0.s8 %v1232
        %v1234 = vlaneseq
        %v1235 = vshrl.u32 %v1234, 7
        %v1236 = vsub.s32 %v1233, %v1235
        %v1237 = vrot.slane %v1223, %v1236
        %v1238 = vcombine.high %v608, 0.0
        %v1240 = vunpack.c.l.s4 1983009808
        %v1241 = vunpack.c.0.s8 %v1240
        %v1242 = vlaneseq
        %v1243 = vshrl.u32 %v1242, 7
        %v1244 = vsub.s32 %v1241, %v1243
        %v1245 = vrot.slane %v608, %v1244
        %v1247 = vunpack.c.l.s4 1983009808
        %v1248 = vunpack.c.0.s8 %v1247
        %v1249 = vlaneseq
        %v1250 = vshrl.u32 %v1249, 7
        %v1251 = vsub.s32 %v1248, %v1250
        %v1252 = vrot.slane %v1238, %v1251
        %v1253 = vcombine.low %v1230, %v1245
        %v1254 = vcombine.high %v1230, %v1245
        %v1256 = vunpack.c.l.s4 1934713408
        %v1257 = vunpack.c.0.s8 %v1256
        %v1258 = vlaneseq
        %v1259 = vshrl.u32 %v1258, 7
        %v1260 = vsub.s32 %v1257, %v1259
        %v1261 = vrot.slane %v1253, %v1260
        %v1263 = vunpack.c.l.s4 1934713408
        %v1264 = vunpack.c.0.s8 %v1263
        %v1265 = vlaneseq
        %v1266 = vshrl.u32 %v1265, 7
        %v1267 = vsub.s32 %v1264, %v1266
        %v1268 = vrot.slane %v1254, %v1267
        %v1269 = vcombine.low %v1237, %v1252
        %v1270 = vcombine.high %v1237, %v1252
        %v1272 = vunpack.c.l.s4 1934713408
        %v1273 = vunpack.c.0.s8 %v1272
        %v1274 = vlaneseq
        %v1275 = vshrl.u32 %v1274, 7
        %v1276 = vsub.s32 %v1273, %v1275
        %v1277 = vrot.slane %v1269, %v1276
        %v1279 = vunpack.c.l.s4 1934713408
        %v1280 = vunpack.c.0.s8 %v1279
        %v1281 = vlaneseq
        %v1282 = vshrl.u32 %v1281, 7
        %v1283 = vsub.s32 %v1280, %v1282
        %v1284 = vrot.slane %v1270, %v1283
        %v1285 = vcombine.high %v1261, 0.0
        %v1286 = vcombine.high %v1268, 0.0
        %v1287 = vcombine.high %v1277, 0.0
        %v1288 = vcombine.high %v1284, 0.0
        %1292 = vrot.lane.b32.xlu0 %v742, 16
        %v1293 = vpop.permute.xlu0 %1292
        %1294 = vrot.lane.b32.xlu0 %v878, 16
        %v1295 = vpop.permute.xlu0 %1294
        %1296 = vrot.lane.b32.xlu0 %v947, 16
        %v1297 = vpop.permute.xlu0 %1296
        %1304 = vrot.lane.b32.xlu0 %v743, 32
        %v1305 = vpop.permute.xlu0 %1304
        %1306 = vrot.lane.b32.xlu0 %v879, 32
        %v1307 = vpop.permute.xlu0 %1306
        %1308 = vrot.lane.b32.xlu0 %v930, 32
        %v1309 = vpop.permute.xlu0 %1308
        %1316 = vrot.lane.b32.xlu0 %v744, 48
        %v1317 = vpop.permute.xlu0 %1316
        %1318 = vrot.lane.b32.xlu0 %v880, 48
        %v1319 = vpop.permute.xlu0 %1318
        %1320 = vrot.lane.b32.xlu0 %v948, 48
        %v1321 = vpop.permute.xlu0 %1320
        %1328 = vrot.lane.b32.xlu0 %v745, 64
        %v1329 = vpop.permute.xlu0 %1328
        %1330 = vrot.lane.b32.xlu0 %v881, 64
        %v1331 = vpop.permute.xlu0 %1330
        %1332 = vrot.lane.b32.xlu0 %v939, 64
        %v1333 = vpop.permute.xlu0 %1332
        %1340 = vrot.lane.b32.xlu0 %v746, 80
        %v1341 = vpop.permute.xlu0 %1340
        %1342 = vrot.lane.b32.xlu0 %v882, 80
        %v1343 = vpop.permute.xlu0 %1342
        %1344 = vrot.lane.b32.xlu0 %v949, 80
        %v1345 = vpop.permute.xlu0 %1344
        %1352 = vrot.lane.b32.xlu0 %v747, 96
        %v1353 = vpop.permute.xlu0 %1352
        %1354 = vrot.lane.b32.xlu0 %v883, 96
        %v1355 = vpop.permute.xlu0 %1354
        %1356 = vrot.lane.b32.xlu0 %v946, 96
        %v1357 = vpop.permute.xlu0 %1356
        %1364 = vrot.lane.b32.xlu0 %v748, 112
        %v1365 = vpop.permute.xlu0 %1364
        %1366 = vrot.lane.b32.xlu0 %v884, 112
        %v1367 = vpop.permute.xlu0 %1366
        %1368 = vrot.lane.b32.xlu0 %v950, 112
        %v1369 = vpop.permute.xlu0 %1368
        %1376 = vrot.lane.b32.xlu0 %v1080, 16
        %v1377 = vpop.permute.xlu0 %1376
        %1378 = vrot.lane.b32.xlu0 %v1216, 16
        %v1379 = vpop.permute.xlu0 %1378
        %1380 = vrot.lane.b32.xlu0 %v1285, 16
        %v1381 = vpop.permute.xlu0 %1380
        %1388 = vrot.lane.b32.xlu0 %v1081, 32
        %v1389 = vpop.permute.xlu0 %1388
        %1390 = vrot.lane.b32.xlu0 %v1217, 32
        %v1391 = vpop.permute.xlu0 %1390
        %1392 = vrot.lane.b32.xlu0 %v1268, 32
        %v1393 = vpop.permute.xlu0 %1392
        %1400 = vrot.lane.b32.xlu0 %v1082, 48
        %v1401 = vpop.permute.xlu0 %1400
        %1402 = vrot.lane.b32.xlu0 %v1218, 48
        %v1403 = vpop.permute.xlu0 %1402
        %1404 = vrot.lane.b32.xlu0 %v1286, 48
        %v1405 = vpop.permute.xlu0 %1404
        %1412 = vrot.lane.b32.xlu0 %v1083, 64
        %v1413 = vpop.permute.xlu0 %1412
        %1414 = vrot.lane.b32.xlu0 %v1219, 64
        %v1415 = vpop.permute.xlu0 %1414
        %1416 = vrot.lane.b32.xlu0 %v1277, 64
        %v1417 = vpop.permute.xlu0 %1416
        %1424 = vrot.lane.b32.xlu0 %v1084, 80
        %v1425 = vpop.permute.xlu0 %1424
        %1426 = vrot.lane.b32.xlu0 %v1220, 80
        %v1427 = vpop.permute.xlu0 %1426
        %1428 = vrot.lane.b32.xlu0 %v1287, 80
        %v1429 = vpop.permute.xlu0 %1428
        %1436 = vrot.lane.b32.xlu0 %v1085, 96
        %v1437 = vpop.permute.xlu0 %1436
        %1438 = vrot.lane.b32.xlu0 %v1221, 96
        %v1439 = vpop.permute.xlu0 %1438
        %1440 = vrot.lane.b32.xlu0 %v1284, 96
        %v1441 = vpop.permute.xlu0 %1440
        %1448 = vrot.lane.b32.xlu0 %v1086, 112
        %v1449 = vpop.permute.xlu0 %1448
        %1450 = vrot.lane.b32.xlu0 %v1222, 112
        %v1451 = vpop.permute.xlu0 %1450
        %1452 = vrot.lane.b32.xlu0 %v1288, 112
        %v1453 = vpop.permute.xlu0 %1452
        %vm1457 = vcmask 130048
        %v1458 = vsel %vm1457, %v741, %v1293
        %v1459 = vsel %vm1457, %v877, %v1295
        %v1460 = vsel %vm1457, %v923, %v1297
        %vm1461 = vcmask 261120
        %v1462 = vsel %vm1461, %v1458, %v1305
        %v1463 = vsel %vm1461, %v1459, %v1307
        %v1464 = vsel %vm1461, %v1460, %v1309
        %vm1465 = vcmask 392192
        %v1466 = vsel %vm1465, %v1462, %v1317
        %v1467 = vsel %vm1465, %v1463, %v1319
        %v1468 = vsel %vm1465, %v1464, %v1321
        %vm1469 = vcmask 523264
        %v1470 = vsel %vm1469, %v1466, %v1329
        %v1471 = vsel %vm1469, %v1467, %v1331
        %v1472 = vsel %vm1469, %v1468, %v1333
        %vm1473 = vcmask 654336
        %v1474 = vsel %vm1473, %v1470, %v1341
        %v1475 = vsel %vm1473, %v1471, %v1343
        %v1476 = vsel %vm1473, %v1472, %v1345
        %vm1477 = vcmask 785408
        %v1478 = vsel %vm1477, %v1474, %v1353
        %v1479 = vsel %vm1477, %v1475, %v1355
        %v1480 = vsel %vm1477, %v1476, %v1357
        %vm1481 = vcmask 916480
        %v1482 = vsel %vm1481, %v1478, %v1365
        %v1483 = vsel %vm1481, %v1479, %v1367
        %v1484 = vsel %vm1481, %v1480, %v1369
        %v1485 = vsel %vm1457, %v1079, %v1377
        %v1486 = vsel %vm1457, %v1215, %v1379
        %v1487 = vsel %vm1457, %v1261, %v1381
        %v1488 = vsel %vm1461, %v1485, %v1389
        %v1489 = vsel %vm1461, %v1486, %v1391
        %v1490 = vsel %vm1461, %v1487, %v1393
        %v1491 = vsel %vm1465, %v1488, %v1401
        %v1492 = vsel %vm1465, %v1489, %v1403
        %v1493 = vsel %vm1465, %v1490, %v1405
        %v1494 = vsel %vm1469, %v1491, %v1413
        %v1495 = vsel %vm1469, %v1492, %v1415
        %v1496 = vsel %vm1469, %v1493, %v1417
        %v1497 = vsel %vm1473, %v1494, %v1425
        %v1498 = vsel %vm1473, %v1495, %v1427
        %v1499 = vsel %vm1473, %v1496, %v1429
        %v1500 = vsel %vm1477, %v1497, %v1437
        %v1501 = vsel %vm1477, %v1498, %v1439
        %v1502 = vsel %vm1477, %v1499, %v1441
        %v1503 = vsel %vm1481, %v1500, %v1449
        %v1504 = vsel %vm1481, %v1501, %v1451
        %v1505 = vsel %vm1481, %v1502, %v1453
        %v1506 = vld [vmem:[%s2] sm:$0x7]
        %vm1507 = vcmask 146432
        %v1509 = vsel %vm1507, %v1506, 0
        %vm1511 = vcmask 1041408
        %v1513 = vsel %vm1511, %v1484, 0
        %v1516 = vsel %vm1511, %v1505, 0
        %1518 = vmatprep.subr.mxu0 %v1503
        %1519 = vmatpush1.msra.mxu0 %v1482
        %1520 = vmatprep.subr.mxu0 %v1504
        %1521 = vmatpush1.msra.mxu0 %v1483
        %1522 = vmatprep.subr.mxu0 %v1516
        %1523 = vmatpush1.msra.mxu0 %v1513
        %1524 = vmatprep.subr.mxu0 0.0
        %1525 = vmatpush1.msra.mxu0 0.0
        %1526 = vmatprep.subr.mxu0 0.0
        %1527 = vmatpush1.msra.mxu0 0.0
        %1528 = vmatprep.subr.mxu0 0.0
        %1529 = vmatpush1.msra.mxu0 0.0
        %1530 = vmatprep.subr.mxu0 0.0
        %1531 = vmatpush1.msra.mxu0 0.0
        %1532 = vmatprep.subr.mxu0 0.0
        %1533 = vmatpush1.msra.mxu0 0.0
        %1534 = vmatprep.subr.mxu0 0.0
        %1535 = vmatpush1.msra.mxu0 0.0
        %1536 = vmatprep.subr.mxu0 0.0
        %1537 = vmatpush1.msra.mxu0 0.0
        %1538 = vmatprep.subr.mxu0 0.0
        %1539 = vmatpush1.msra.mxu0 0.0
        %1540 = vmatprep.subr.mxu0 0.0
        %1541 = vmatpush1.msra.mxu0 0.0
        %1542 = vmatprep.subr.mxu0 0.0
        %1543 = vmatpush1.msra.mxu0 0.0
        %1544 = vmatprep.subr.mxu0 0.0
        %1545 = vmatpush1.msra.mxu0 0.0
        %1546 = vmatprep.subr.mxu0 0.0
        %1547 = vmatpush1.msra.mxu0 0.0
        %1548 = vmatprep.subr.mxu0 0.0
        %1549 = vmatpush1.msra.mxu0 0.0
        %1550 = vmatprep.subr.mxu0 0.0
        %1551 = vmatpush1.msra.mxu0 0.0
        %1552 = vmatprep.subr.mxu0 0.0
        %1553 = vmatpush1.msra.mxu0 0.0
        %1554 = vmatprep.subr.mxu0 0.0
        %1555 = vmatpush1.msra.mxu0 0.0
        %1556 = vmatprep.subr.mxu0 0.0
        %1557 = vmatpush1.msra.mxu0 0.0
        %1558 = vmatprep.subr.mxu0 0.0
        %1559 = vmatpush1.msra.mxu0 0.0
        %1560 = vmatprep.subr.mxu0 0.0
        %1561 = vmatpush1.msra.mxu0 0.0
        %1562 = vmatprep.subr.mxu0 0.0
        %1563 = vmatpush1.msra.mxu0 0.0
        %1564 = vmatprep.subr.mxu0 0.0
        %1565 = vmatpush1.msra.mxu0 0.0
        %1566 = vmatprep.subr.mxu0 0.0
        %1567 = vmatpush1.msra.mxu0 0.0
        %1568 = vmatprep.subr.mxu0 0.0
        %1569 = vmatpush1.msra.mxu0 0.0
        %1570 = vmatprep.subr.mxu0 0.0
        %1571 = vmatpush1.msra.mxu0 0.0
        %1572 = vmatprep.subr.mxu0 0.0
        %1573 = vmatpush1.msra.mxu0 0.0
        %1574 = vmatprep.subr.mxu0 0.0
        %1575 = vmatpush1.msra.mxu0 0.0
        %1576 = vmatprep.subr.mxu0 0.0
        %1577 = vmatpush1.msra.mxu0 0.0
        %1578 = vmatprep.subr.mxu0 0.0
        %1579 = vmatpush1.msra.mxu0 0.0
        %1580 = vmatprep.subr.mxu0 0.0
        %1581 = vmatpush1.msra.mxu0 0.0
        %1582 = vmatprep.mubr.f32.mxu0 0.0
        %1583 = vmatmul.mubr.f32.gmra.mrb[0].mxu0 %v1509
        %v1584 = vpop.f32.mrb[0].mxu0
        %v1585 = vadd.f32 0.0, %v1584
        %v1586 = vpop.f32.mrb[0].mxu0
        %v1587 = vadd.f32 0.0, %v1586
        %1588 = vdwg.mxu0
        %v1589 = vld [vmem:[%s3] sm:$0xff]
        %v1590 = vld [vmem:[%s4] sm:$0xff]
        %1592 = vset.pattern.permute.xlu0 0
        %1593 = vperm.xlu0 %1592, %v1590
        %v1594 = vpop.permute.xlu0 %1593
        %vm1596 = vcmask 23552
        %v1598 = vsel %vm1596, %v1589, 0
        %vm1600 = vcmask 1042432
        %v1602 = vsel %vm1600, %v1585, 0
        %v1605 = vsel %vm1600, %v1587, 0
        %1607 = vmatprep.subr.mxu0 %v1605
        %1608 = vmatpush1.msra.mxu0 %v1602
        %1609 = vmatprep.subr.mxu0 0.0
        %1610 = vmatpush1.msra.mxu0 0.0
        %1611 = vmatprep.subr.mxu0 0.0
        %1612 = vmatpush1.msra.mxu0 0.0
        %1613 = vmatprep.subr.mxu0 0.0
        %1614 = vmatpush1.msra.mxu0 0.0
        %1615 = vmatprep.subr.mxu0 0.0
        %1616 = vmatpush1.msra.mxu0 0.0
        %1617 = vmatprep.subr.mxu0 0.0
        %1618 = vmatpush1.msra.mxu0 0.0
        %1619 = vmatprep.subr.mxu0 0.0
        %1620 = vmatpush1.msra.mxu0 0.0
        %1621 = vmatprep.subr.mxu0 0.0
        %1622 = vmatpush1.msra.mxu0 0.0
        %1623 = vmatprep.subr.mxu0 0.0
        %1624 = vmatpush1.msra.mxu0 0.0
        %1625 = vmatprep.subr.mxu0 0.0
        %1626 = vmatpush1.msra.mxu0 0.0
        %1627 = vmatprep.subr.mxu0 0.0
        %1628 = vmatpush1.msra.mxu0 0.0
        %1629 = vmatprep.subr.mxu0 0.0
        %1630 = vmatpush1.msra.mxu0 0.0
        %1631 = vmatprep.subr.mxu0 0.0
        %1632 = vmatpush1.msra.mxu0 0.0
        %1633 = vmatprep.subr.mxu0 0.0
        %1634 = vmatpush1.msra.mxu0 0.0
        %1635 = vmatprep.subr.mxu0 0.0
        %1636 = vmatpush1.msra.mxu0 0.0
        %1637 = vmatprep.subr.mxu0 0.0
        %1638 = vmatpush1.msra.mxu0 0.0
        %1639 = vmatprep.subr.mxu0 0.0
        %1640 = vmatpush1.msra.mxu0 0.0
        %1641 = vmatprep.subr.mxu0 0.0
        %1642 = vmatpush1.msra.mxu0 0.0
        %1643 = vmatprep.subr.mxu0 0.0
        %1644 = vmatpush1.msra.mxu0 0.0
        %1645 = vmatprep.subr.mxu0 0.0
        %1646 = vmatpush1.msra.mxu0 0.0
        %1647 = vmatprep.subr.mxu0 0.0
        %1648 = vmatpush1.msra.mxu0 0.0
        %1649 = vmatprep.subr.mxu0 0.0
        %1650 = vmatpush1.msra.mxu0 0.0
        %1651 = vmatprep.subr.mxu0 0.0
        %1652 = vmatpush1.msra.mxu0 0.0
        %1653 = vmatprep.subr.mxu0 0.0
        %1654 = vmatpush1.msra.mxu0 0.0
        %1655 = vmatprep.subr.mxu0 0.0
        %1656 = vmatpush1.msra.mxu0 0.0
        %1657 = vmatprep.subr.mxu0 0.0
        %1658 = vmatpush1.msra.mxu0 0.0
        %1659 = vmatprep.subr.mxu0 0.0
        %1660 = vmatpush1.msra.mxu0 0.0
        %1661 = vmatprep.subr.mxu0 0.0
        %1662 = vmatpush1.msra.mxu0 0.0
        %1663 = vmatprep.subr.mxu0 0.0
        %1664 = vmatpush1.msra.mxu0 0.0
        %1665 = vmatprep.subr.mxu0 0.0
        %1666 = vmatpush1.msra.mxu0 0.0
        %1667 = vmatprep.subr.mxu0 0.0
        %1668 = vmatpush1.msra.mxu0 0.0
        %1669 = vmatprep.subr.mxu0 0.0
        %1670 = vmatpush1.msra.mxu0 0.0
        %1671 = vmatprep.mubr.f32.mxu0 0.0
        %1672 = vmatmul.mubr.f32.gmra.mrb[0].mxu0 %v1598
        %v1673 = vpop.f32.mrb[0].mxu0
        %v1674 = vadd.f32 %v1594, %v1673
        %v1675 = vpop.f32.mrb[0].mxu0
        %v1676 = vadd.f32 %v1594, %v1675
        %1677 = vdwg.mxu0
        %1678 = vst [vmem:[%s231] sm:$0xff] %v1674
        %1679 = vst [vmem:[%s231 + $0x8] sm:$0xff] %v1676
        %s1680 = sand.u32 %s151, 1
        %s1681 = scalar_lea.sflag [#allocation4], %s1680
        %s1682 = sand.u32 %s151, 1
        %s1683 = smul.addr %s1682, 16
        %s1684 = scalar_lea.vmem [#allocation3], %s1683
        // Predicated region
        $region45: #{tpu_custom_call.1} parent=39 // pred_check
          %p1685 = pneg %p161
        $region46: #{tpu_custom_call.1} parent=39 // pred_check_branch
          %1687 = sbr.rel (%p1685) target = $region48
        $region47: #{tpu_custom_call.1} parent=39 // pred_region
          %s1688 = smul.u32 2, %s24
          %s1690 = ssub.s32 256, 256
          %1691 = vsyncadd %s1681, %s1690
          %s1692 = smul.addr %s23, 2
          %s1693 = sadd.s32 %s1688, %s1692
          %s1694 = smul.addr %s1693, 128
          %s1695 = scalar_lea.hbm %s5, %s1694
          %s1697 = sshll.u32 %s1684, 4
          %s1698 = int_to_ptr.vmem [resolvable:$true] %s1697
          %1700 = dma.vmem_to_hbm [thread:$0]  %s1698, 256, %s1695, %s1681
        $region48: #{tpu_custom_call.1} parent=39 // pred_fallthru
          _
      $region40: #{tpu_custom_call.1} parent=5 // pred_fallthru
        _
      %p1701 = scmp.le.s32.totalorder 2, %s14
      // Predicated region
      $region49: #{tpu_custom_call.1} parent=5 // pred_check
        %p1702 = pneg %p1701
      $region50: #{tpu_custom_call.1} parent=5 // pred_check_branch
        %1704 = sbr.rel (%p1702) target = $region52
      $region51: #{tpu_custom_call.1} parent=5 // pred_region
        %s1705 = ssub.s32 %s14, 2
        // Predicated region
        $region53: #{tpu_custom_call.1} parent=51 // pred_check
          %p1706 = pneg %p167
        $region54: #{tpu_custom_call.1} parent=51 // pred_check_branch
          %1708 = sbr.rel (%p1706) target = $region56
        $region55: #{tpu_custom_call.1} parent=51 // pred_region
          %s1709 = sand.u32 %s152, 1
          %s1710 = scalar_lea.sflag [#allocation4], %s1709
          %s1711 = sand.u32 %s152, 1
          %s1712 = smul.addr %s1711, 16
          %s1713 = scalar_lea.vmem [#allocation3], %s1712
          %1714 = dma.done %s1710, 256
        $region56: #{tpu_custom_call.1} parent=51 // pred_fallthru
          _
      $region52: #{tpu_custom_call.1} parent=5 // pred_fallthru
        _
    $region6: #{tpu_custom_call.1} parent=1 // loop_footer
      %s18 = sadd.s32 1, %s14
    $region7: #{tpu_custom_call.1} parent=1 // loop_footer_branch
      %13 = sbr.rel target = $region3
    $region8: #{tpu_custom_call.1} parent=1 // loop_exit
      _
    %1715 = vsyncpa [#allocation4], 1
    %s1716 = scalar_lea.sflag [#allocation4], 1
    %1717 = vsyncpa %s1716, 1

</llo_original>
